<compile_context>
chip_gen: v7x
topology: tpu7x:2x2x1
jax: 0.10.0
libtpu: 0.0.40
codegen_flags: <defaults>
</compile_context>

<pallas_src>
import functools

import jax
import jax.numpy as jnp
from jax import lax
from jax.experimental import pallas as pl
from jax.experimental.pallas import tpu as pltpu


def _spa_kernel(x_ref, w1_ref, b1_ref, w2_ref, b2_ref, red_ref, exp_ref, o_ref,
                *, inv_w, prec):
    x = x_ref[...]                                          # (R, THW) lane-dense, input dtype
    # mean over W: ONE stacked reduce matmul over all R = tb*C rows
    # (MXU, f32 accumulation), then scale by 1/W.
    y = jnp.dot(x, red_ref[...], preferred_element_type=jnp.float32,
                precision=prec) * inv_w                     # (R, TH) f32 means
    # squeeze-excite MLP (1x1 conv -> relu -> 1x1 conv -> sigmoid), batched
    # over the tb tile via block-diagonal (kron) weights: one matmul / layer.
    h1 = jnp.dot(w1_ref[...], y, preferred_element_type=jnp.float32,
                 precision=prec) + b1_ref[...]              # (tb*mid, TH)
    h1 = jnp.maximum(h1, 0.0)
    h2 = jnp.dot(w2_ref[...], h1, preferred_element_type=jnp.float32,
                 precision=prec) + b2_ref[...]              # (R, TH)
    att = jax.nn.sigmoid(h2).astype(x.dtype)                # tiny cast only
    # broadcast attention over W via ONE expand matmul (exact: one term/col).
    att_exp = jnp.dot(att, exp_ref[...], precision=prec)    # (R, THW), x.dtype
    o_ref[...] = x * att_exp                                # big product stays in x.dtype


def _tpu_vmem_capacity():
    try:
        return int(pltpu.get_tpu_info().vmem_capacity_bytes)
    except Exception:
        return 64 << 20            # conservative: v7x per-TensorCore VMEM


def _choose_tiles(B, C, H, W, itemsize, target_bytes, vmem_budget, max_tb=8):
    """Pick (tb, th): smallest lane-dense TH, then grow tb toward the target."""
    # TH: smallest divisor of H whose block width TH*W is a multiple of 128
    # (unmasked lane-dense loads/stores); fall back to the full H extent.
    ths = [t for t in range(1, H + 1) if H % t == 0 and (t * W) % 128 == 0]
    th = min(ths) if ths else H
    per_b = C * th * W * itemsize
    # VMEM need ~ 4x block (in + out, double-buffered) + constants + headroom.
    const_bytes = 2 * th * th * W * itemsize                # red + expm
    avail = max(per_b, (vmem_budget - 2 * const_bytes - (6 << 20)) // 4)
    cap = max(1, min(max_tb, B, min(target_bytes, avail) // per_b))
    # tb must divide B and keep the block's sublane extent legal
    # (tb*C % 8 == 0, or the full B*C extent).  max_tb bounds kron waste.
    ok = lambda t: B % t == 0 and ((t * C) % 8 == 0 or t == B)
    cands = [t for t in range(1, B + 1) if ok(t)]
    under = [t for t in cands if t <= cap]
    tb = max(under) if under else min(cands)
    return tb, th


def spectral_pooling_attention(x, w1, b1, w2, b2):
    """x: (B, C, H, W); w1: (mid, C); b1: (mid,); w2: (C, mid); b2: (C,)."""
    B, C, H, W = x.shape
    mid = w1.shape[0]
    assert w2.shape[0] == C, "out_channels must equal in_channels (expand_as)"

    itemsize = x.dtype.itemsize
    vmem_cap = _tpu_vmem_capacity()
    vmem_budget = (vmem_cap * 3) // 4                 # 48 MiB on v7x, 96 MiB on v5e/v6e
    target_bytes = (3 << 20) if vmem_cap >= (96 << 20) else (3 << 19)
    tb, th = _choose_tiles(B, C, H, W, itemsize, target_bytes, vmem_budget)
    thw = th * W
    rows = tb * C

    # Lane-dense folded layout (free reshape of a contiguous NCHW tensor):
    # rows are (b, c) pairs, columns are (h, w) pairs.
    x2 = x.reshape(B * C, H * W)

    # Constant 0/1 pooling / broadcast matrices in the input dtype (exact).
    hw_to_h = jnp.arange(thw, dtype=jnp.int32) // W
    red = (hw_to_h[:, None] ==
           jnp.arange(th, dtype=jnp.int32)[None, :]).astype(x.dtype)   # (THW, TH)
    expm = red.T                                                        # (TH, THW)

    # MLP weights Kronecker-expanded to block-diagonal over the tb batch tile
    # so the whole block is ONE matmul per layer (no in-kernel reshapes).
    eye_tb = jnp.eye(tb, dtype=jnp.float32)
    w1big = jnp.kron(eye_tb, w1.astype(jnp.float32))            # (tb*mid, tb*C)
    w2big = jnp.kron(eye_tb, w2.astype(jnp.float32))            # (tb*C, tb*mid)
    b1big = jnp.tile(b1.astype(jnp.float32), tb).reshape(tb * mid, 1)
    b2big = jnp.tile(b2.astype(jnp.float32), tb).reshape(tb * C, 1)

    # Precision gating: exact f32 means need HIGHEST; bf16 inputs are exact
    # with the 0/1 matrices already, so skip the 3x multi-pass MXU cost.
    prec = (lax.Precision.HIGHEST if x.dtype == jnp.float32
            else lax.Precision.DEFAULT)

    grid = (B // tb, H // th)
    kernel = functools.partial(_spa_kernel, inv_w=1.0 / W, prec=prec)

    # Advisory cost estimate: the op is HBM-bandwidth bound (reads+writes x).
    blocks = grid[0] * grid[1]
    macs = blocks * (rows * thw * th                 # reduce
                     + (tb * mid) * (tb * C) * th    # conv1 (kron-padded)
                     + (tb * C) * (tb * mid) * th    # conv2
                     + rows * th * thw)              # expand
    const_bytes = ((red.size + expm.size) * itemsize
                   + (w1big.size + w2big.size + b1big.size + b2big.size) * 4)
    cost = pl.CostEstimate(
        flops=int(2 * macs),
        transcendentals=int(B * C * H),
        bytes_accessed=int(2 * B * C * H * W * itemsize + const_bytes))

    # Raise the scoped-VMEM limit whenever the need exceeds the smallest
    # default scoped limit (16 MiB on v5e; 32 MiB on v6e/v7x); never request
    # more than ~3/4 of the generation's physical VMEM (64 MiB/TC on v7x).
    block_bytes = rows * thw * itemsize
    vmem_needed = 4 * block_bytes + 2 * const_bytes + (4 << 20)
    vmem_limit = (int(min(max(vmem_needed, 32 << 20), vmem_budget))
                  if vmem_needed > (16 << 20) else None)

    out2 = pl.pallas_call(
        kernel,
        out_shape=jax.ShapeDtypeStruct((B * C, H * W), x.dtype),
        grid_spec=pltpu.PrefetchScalarGridSpec(
            num_scalar_prefetch=0,
            grid=grid,
            in_specs=[
                pl.BlockSpec((rows, thw), lambda bi, hi: (bi, hi)),   # x block
                pl.BlockSpec(w1big.shape, lambda bi, hi: (0, 0)),
                pl.BlockSpec(b1big.shape, lambda bi, hi: (0, 0)),
                pl.BlockSpec(w2big.shape, lambda bi, hi: (0, 0)),
                pl.BlockSpec(b2big.shape, lambda bi, hi: (0, 0)),
                pl.BlockSpec(red.shape, lambda bi, hi: (0, 0)),
                pl.BlockSpec(expm.shape, lambda bi, hi: (0, 0)),
            ],
            out_specs=pl.BlockSpec((rows, thw), lambda bi, hi: (bi, hi)),
        ),
        compiler_params=pltpu.CompilerParams(
            dimension_semantics=("parallel", "parallel"),
            vmem_limit_bytes=vmem_limit),
        cost_estimate=cost,
    )(x2, w1big, b1big, w2big, b2big, red, expm)

    return out2.reshape(B, C, H, W)


def _reference(x, w1, b1, w2, b2):
    # Pure-JAX reference of the PyTorch forward.
    prec = lax.Precision.HIGHEST
    y = jnp.mean(x, axis=-1)                                          # (B, C, H)
    h1 = jnp.einsum('mc,bch->bmh', w1, y, precision=prec) + b1[None, :, None]
    h1 = jnp.maximum(h1, 0.0)
    h2 = jnp.einsum('cm,bmh->bch', w2, h1, precision=prec) + b2[None, :, None]
    att = jax.nn.sigmoid(h2)                                          # (B, C, H)
    return x * att[..., None]


if __name__ == "__main__":
    key = jax.random.PRNGKey(0)
    B, C, H, W = 2, 4, 16, 16
    reduction = 16
    mid = max(C // reduction, 1)

    kx, k1, k2, k3, k4 = jax.random.split(key, 5)
    x = jax.random.normal(kx, (B, C, H, W), dtype=jnp.float32)

    # Deterministic parameter init (Conv2d 1x1 weights collapse to matrices).
    w1 = jax.random.normal(k1, (mid, C), dtype=jnp.float32) * 0.1   # conv1.weight
    b1 = jax.random.normal(k2, (mid,), dtype=jnp.float32) * 0.1     # conv1.bias
    w2 = jax.random.normal(k3, (C, mid), dtype=jnp.float32) * 0.1   # conv2.weight
    b2 = jax.random.normal(k4, (C,), dtype=jnp.float32) * 0.1       # conv2.bias

    out = spectral_pooling_attention(x, w1, b1, w2, b2)
    out = jax.block_until_ready(out)

    ref = _reference(x, w1, b1, w2, b2)
    assert out.shape == (B, C, H, W)
    assert jnp.allclose(out, ref, atol=2e-5, rtol=2e-5)

    print("KERNEL_OK")
</pallas_src>

<mosaic_0001>
module attributes {stable_mosaic.version = 11 : i64} {
  func.func @_spa_kernel(%arg0: i32, %arg1: i32, %arg2: memref<8x128xf32, #tpu.memory_space<vmem>>, %arg3: memref<2x8xf32, #tpu.memory_space<vmem>>, %arg4: memref<2x1xf32, #tpu.memory_space<vmem>>, %arg5: memref<8x2xf32, #tpu.memory_space<vmem>>, %arg6: memref<8x1xf32, #tpu.memory_space<vmem>>, %arg7: memref<128x8xf32, #tpu.memory_space<vmem>>, %arg8: memref<8x128xf32, #tpu.memory_space<vmem>>, %arg9: memref<8x128xf32, #tpu.memory_space<vmem>>) attributes {dimension_semantics = [#tpu.dimension_semantics<parallel>, #tpu.dimension_semantics<parallel>], iteration_bounds = array<i64: 1, 2>, scalar_prefetch = 0 : i64, scratch_operands = 0 : i64, tpu.core_type = #tpu.core_type<tc>, window_params = [{transform_indices = @transform_0, window_bounds = array<i64: 8, 128>}, {pipeline_mode = #tpu.pipeline_mode<synchronous>, transform_indices = @transform_1, window_bounds = array<i64: 2, 8>}, {pipeline_mode = #tpu.pipeline_mode<synchronous>, transform_indices = @transform_2, window_bounds = array<i64: 2, 1>}, {pipeline_mode = #tpu.pipeline_mode<synchronous>, transform_indices = @transform_3, window_bounds = array<i64: 8, 2>}, {pipeline_mode = #tpu.pipeline_mode<synchronous>, transform_indices = @transform_4, window_bounds = array<i64: 8, 1>}, {pipeline_mode = #tpu.pipeline_mode<synchronous>, transform_indices = @transform_5, window_bounds = array<i64: 128, 8>}, {pipeline_mode = #tpu.pipeline_mode<synchronous>, transform_indices = @transform_6, window_bounds = array<i64: 8, 128>}, {transform_indices = @transform_7, window_bounds = array<i64: 8, 128>}]} {
    %c0 = arith.constant 0 : index
    %c0_0 = arith.constant 0 : index
    %0 = vector.load %arg2[%c0, %c0_0] : memref<8x128xf32, #tpu.memory_space<vmem>>, vector<8x128xf32>
    %c0_1 = arith.constant 0 : index
    %c0_2 = arith.constant 0 : index
    %1 = vector.load %arg7[%c0_1, %c0_2] : memref<128x8xf32, #tpu.memory_space<vmem>>, vector<128x8xf32>
    %cst = arith.constant dense<0.000000e+00> : vector<8x8xf32>
    %2 = tpu.matmul %0, %1, %cst {dimension_numbers = #tpu.dot_dimension_numbers<[1], [0], [0], [1], [0, 0, 1, 1], [], []>, precision = #tpu.contract_precision<fp32>} : vector<8x128xf32>, vector<128x8xf32>, vector<8x8xf32> -> vector<8x8xf32>
    %cst_3 = arith.constant 6.250000e-02 : f32
    %3 = vector.broadcast %cst_3 : f32 to vector<8x8xf32>
    %4 = arith.mulf %2, %3 : vector<8x8xf32>
    %c0_4 = arith.constant 0 : index
    %c0_5 = arith.constant 0 : index
    %5 = vector.load %arg3[%c0_4, %c0_5] : memref<2x8xf32, #tpu.memory_space<vmem>>, vector<2x8xf32>
    %cst_6 = arith.constant dense<0.000000e+00> : vector<2x8xf32>
    %6 = tpu.matmul %5, %4, %cst_6 {dimension_numbers = #tpu.dot_dimension_numbers<[1], [0], [0], [1], [0, 0, 1, 1], [], []>, precision = #tpu.contract_precision<fp32>} : vector<2x8xf32>, vector<8x8xf32>, vector<2x8xf32> -> vector<2x8xf32>
    %c0_7 = arith.constant 0 : index
    %c0_8 = arith.constant 0 : index
    %7 = vector.load %arg4[%c0_7, %c0_8] : memref<2x1xf32, #tpu.memory_space<vmem>>, vector<2x1xf32>
    %8 = vector.broadcast %7 : vector<2x1xf32> to vector<2x8xf32>
    %9 = arith.addf %6, %8 : vector<2x8xf32>
    %cst_9 = arith.constant 0.000000e+00 : f32
    %10 = vector.broadcast %cst_9 : f32 to vector<2x8xf32>
    %11 = arith.maximumf %9, %10 : vector<2x8xf32>
    %c0_10 = arith.constant 0 : index
    %c0_11 = arith.constant 0 : index
    %12 = vector.load %arg5[%c0_10, %c0_11] : memref<8x2xf32, #tpu.memory_space<vmem>>, vector<8x2xf32>
    %cst_12 = arith.constant dense<0.000000e+00> : vector<8x8xf32>
    %13 = tpu.matmul %12, %11, %cst_12 {dimension_numbers = #tpu.dot_dimension_numbers<[1], [0], [0], [1], [0, 0, 1, 1], [], []>, precision = #tpu.contract_precision<fp32>} : vector<8x2xf32>, vector<2x8xf32>, vector<8x8xf32> -> vector<8x8xf32>
    %c0_13 = arith.constant 0 : index
    %c0_14 = arith.constant 0 : index
    %14 = vector.load %arg6[%c0_13, %c0_14] : memref<8x1xf32, #tpu.memory_space<vmem>>, vector<8x1xf32>
    %15 = vector.broadcast %14 : vector<8x1xf32> to vector<8x8xf32>
    %16 = arith.addf %13, %15 : vector<8x8xf32>
    %17 = arith.negf %16 : vector<8x8xf32>
    %18 = math.exp %17 : vector<8x8xf32>
    %cst_15 = arith.constant 1.000000e+00 : f32
    %19 = vector.broadcast %cst_15 : f32 to vector<8x8xf32>
    %20 = arith.addf %19, %18 : vector<8x8xf32>
    %21 = arith.divf %19, %20 : vector<8x8xf32>
    %c0_16 = arith.constant 0 : index
    %c0_17 = arith.constant 0 : index
    %22 = vector.load %arg8[%c0_16, %c0_17] : memref<8x128xf32, #tpu.memory_space<vmem>>, vector<8x128xf32>
    %cst_18 = arith.constant dense<0.000000e+00> : vector<8x128xf32>
    %23 = tpu.matmul %21, %22, %cst_18 {dimension_numbers = #tpu.dot_dimension_numbers<[1], [0], [0], [1], [0, 0, 1, 1], [], []>, precision = #tpu.contract_precision<fp32>} : vector<8x8xf32>, vector<8x128xf32>, vector<8x128xf32> -> vector<8x128xf32>
    %24 = arith.mulf %0, %23 : vector<8x128xf32>
    %c0_19 = arith.constant 0 : index
    %c0_20 = arith.constant 0 : index
    %25 = vector.load %arg9[%c0_19, %c0_20] : memref<8x128xf32, #tpu.memory_space<vmem>>, vector<8x128xf32>
    tpu.vector_store %arg9[%c0_19, %c0_20], %24 {strides = array<i32>} : memref<8x128xf32, #tpu.memory_space<vmem>>, vector<8x128xf32>,
    return
  }
  func.func @transform_0(%arg0: i32, %arg1: i32) -> (i32, i32) {
    %c0_i32 = arith.constant 0 : i32
    return %arg0, %arg1 : i32, i32
  }
  func.func @transform_1(%arg0: i32, %arg1: i32) -> (i32, i32) {
    %c0_i32 = arith.constant 0 : i32
    %c0_i32_0 = arith.constant 0 : i32
    %c0_i32_1 = arith.constant 0 : i32
    return %c0_i32, %c0_i32_0 : i32, i32
  }
  func.func @transform_2(%arg0: i32, %arg1: i32) -> (i32, i32) {
    %c0_i32 = arith.constant 0 : i32
    %c0_i32_0 = arith.constant 0 : i32
    %c0_i32_1 = arith.constant 0 : i32
    return %c0_i32, %c0_i32_0 : i32, i32
  }
  func.func @transform_3(%arg0: i32, %arg1: i32) -> (i32, i32) {
    %c0_i32 = arith.constant 0 : i32
    %c0_i32_0 = arith.constant 0 : i32
    %c0_i32_1 = arith.constant 0 : i32
    return %c0_i32, %c0_i32_0 : i32, i32
  }
  func.func @transform_4(%arg0: i32, %arg1: i32) -> (i32, i32) {
    %c0_i32 = arith.constant 0 : i32
    %c0_i32_0 = arith.constant 0 : i32
    %c0_i32_1 = arith.constant 0 : i32
    return %c0_i32, %c0_i32_0 : i32, i32
  }
  func.func @transform_5(%arg0: i32, %arg1: i32) -> (i32, i32) {
    %c0_i32 = arith.constant 0 : i32
    %c0_i32_0 = arith.constant 0 : i32
    %c0_i32_1 = arith.constant 0 : i32
    return %c0_i32, %c0_i32_0 : i32, i32
  }
  func.func @transform_6(%arg0: i32, %arg1: i32) -> (i32, i32) {
    %c0_i32 = arith.constant 0 : i32
    %c0_i32_0 = arith.constant 0 : i32
    %c0_i32_1 = arith.constant 0 : i32
    return %c0_i32, %c0_i32_0 : i32, i32
  }
  func.func @transform_7(%arg0: i32, %arg1: i32) -> (i32, i32) {
    %c0_i32 = arith.constant 0 : i32
    return %arg0, %arg1 : i32, i32
  }
}

</mosaic_0001>

<llo_original>
// kernel: tpu_custom_call.1
$region0: #{tpu_custom_call.1}
  #allocation0 [shape = 'u32[]', space=smem, size = 0x4, offset = 0x4, fixed_abs, tag = 'smem constant byte address 0x4 - core index']
  #allocation1 [shape = 'u32[144,128]{1,0:T(1,128)}', space=vmem, size = 0x12000, scoped, tag = 'internal scratch']
  %s0 = inlined_call_operand.vmem [shape: f32[8,256], index: 0, kind: input, shape index: {}]
  %s1 = inlined_call_operand.vmem [shape: f32[2,8], index: 1, kind: input, shape index: {}]
  %s2 = inlined_call_operand.vmem [shape: f32[2,1], index: 2, kind: input, shape index: {}]
  %s3 = inlined_call_operand.vmem [shape: f32[8,2], index: 3, kind: input, shape index: {}]
  %s4 = inlined_call_operand.vmem [shape: f32[8,1], index: 4, kind: input, shape index: {}]
  %s5 = inlined_call_operand.vmem [shape: f32[128,8], index: 5, kind: input, shape index: {}]
  %s6 = inlined_call_operand.vmem [shape: f32[8,128], index: 6, kind: input, shape index: {}]
  %s7 = inlined_call_operand.hbm [shape: f32[8,256], index: 7, kind: output, shape index: {}]
  %s8 = sld [smem:[#allocation0]]
  $region61: #{tpu_custom_call.1} parent=0
    _
  %s10 = ssub.s32 1, %s8
  %s11 = scalar_select 0, %s10, %s8
  $region1: #{tpu_custom_call.1} parent=0
    #allocation2 [shape = 'u8[8192]{0}', space=vmem, size = 0x2000, scoped, tag = 'output window, operand 0']
    #allocation3 [shape = 's32[2]{0}', space=sflag, size = 0x8, scoped, tag = 'scoped memory for tpu_custom_call.1']
    %12 = vsyncpa [#allocation3], 0
    %s13 = scalar_lea.sflag [#allocation3], 1
    %14 = vsyncpa %s13, 0
    loop: start=0, step=1, limit=4
    $region2: #{tpu_custom_call.1} parent=1 // loop_pre_header
      _
    $region3: #{tpu_custom_call.1} parent=1 // loop_header
      %s16 = sphi 0, %s20
      %p17 = scmp.ge.s32.totalorder %s16, 4
      %s23 = sphi 0, %s35
      %s24 = sphi 0, %s31
      %s25 = sphi 0, %s23
      %s26 = sphi 0, %s24
      %s27 = sphi 0, %s25
      %s28 = sphi 0, %s26
      %s40 = sphi 0, %s42
      %s43 = sphi 0, %s40
      %s44 = sphi 0, %s43
      %s60 = sphi 0, %s44
      %s64 = sphi 0, %s64
      %s66 = sphi 0, %s64
      %s67 = sphi 0, %s66
      %s81 = sphi 0, %s67
      %s85 = sphi 0, %s85
      %s87 = sphi 0, %s85
      %s88 = sphi 0, %s87
      %s102 = sphi 0, %s88
      %s106 = sphi 0, %s106
      %s108 = sphi 0, %s106
      %s109 = sphi 0, %s108
      %s123 = sphi 0, %s109
      %s127 = sphi 0, %s127
      %s129 = sphi 0, %s127
      %s130 = sphi 0, %s129
      %s144 = sphi 0, %s130
      %s148 = sphi 0, %s148
      %s150 = sphi 0, %s148
      %s151 = sphi 0, %s150
      %s165 = sphi 0, %s151
      %s169 = sphi 0, %s169
      %s171 = sphi 0, %s169
      %s172 = sphi 0, %s171
      %s186 = sphi 0, %s172
      %s194 = sphi 0, %s196
      %s197 = sphi 0, %s194
      %s198 = sphi 0, %s197
      %s214 = sphi 0, %s198
    $region4: #{tpu_custom_call.1} parent=1 // loop_header_branch
      %19 = sbr.rel (%p17) target = $region8
    $region5: #{tpu_custom_call.1} parent=1 // loop_body
      %s21 = ssub.s32 %s16, 1
      %s22 = ssub.s32 %s16, 2
      %s29 = sadd.s32 1, %s24
      %p30 = scmp.ge.s32.totalorder %s29, 2
      %s31 = scalar_select %p30, 0, %s29
      %s32 = sadd.s32 1, %s23
      %s33 = scalar_select %p30, %s32, %s23
      %p34 = scmp.ge.s32.totalorder %s33, 1
      %s35 = scalar_select %p34, 0, %s33
      %s36 = ssub.s32 %s23, %s35
      %s37 = ssub.s32 %s24, %s31
      %s38 = sor.u32 %s36, %s37
      %p39 = scmp.eq.s32.totalorder %s38, 0
      %s41 = sadd.s32 %s40, 1
      %s42 = scalar_select %p39, %s40, %s41
      %p45 = pneg %p39
      %p46 = scmp.eq.s32.totalorder %s16, 1
      %p47 = por %p45, %p46
      %p48 = scmp.ne.s32.totalorder %s40, %s43
      %p49 = scmp.eq.s32.totalorder %s16, 0
      %p50 = por %p48, %p49
      %p51 = scmp.ne.s32.totalorder %s40, %s43
      %p52 = scmp.eq.s32.totalorder %s21, 1
      %p53 = por %p51, %p52
      %p54 = scmp.ne.s32.totalorder %s43, %s44
      %p55 = scmp.eq.s32.totalorder %s21, 0
      %p56 = por %p54, %p55
      %p57 = scmp.ne.s32.totalorder %s43, %s44
      %p58 = scmp.eq.s32.totalorder %s22, 1
      %p59 = por %p57, %p58
      %p61 = scmp.ne.s32.totalorder %s44, %s60
      %p62 = scmp.eq.s32.totalorder %s22, 0
      %p63 = por %p61, %p62
      %s65 = sadd.s32 %s64, 1
      %p68 = scmp.eq.s32.totalorder %s16, 1
      %p69 = scmp.ne.s32.totalorder %s64, %s66
      %p70 = scmp.eq.s32.totalorder %s16, 0
      %p71 = por %p69, %p70
      %p72 = scmp.ne.s32.totalorder %s64, %s66
      %p73 = scmp.eq.s32.totalorder %s21, 1
      %p74 = por %p72, %p73
      %p75 = scmp.ne.s32.totalorder %s66, %s67
      %p76 = scmp.eq.s32.totalorder %s21, 0
      %p77 = por %p75, %p76
      %p78 = scmp.ne.s32.totalorder %s66, %s67
      %p79 = scmp.eq.s32.totalorder %s22, 1
      %p80 = por %p78, %p79
      %p82 = scmp.ne.s32.totalorder %s67, %s81
      %p83 = scmp.eq.s32.totalorder %s22, 0
      %p84 = por %p82, %p83
      %s86 = sadd.s32 %s85, 1
      %p89 = scmp.eq.s32.totalorder %s16, 1
      %p90 = scmp.ne.s32.totalorder %s85, %s87
      %p91 = scmp.eq.s32.totalorder %s16, 0
      %p92 = por %p90, %p91
      %p93 = scmp.ne.s32.totalorder %s85, %s87
      %p94 = scmp.eq.s32.totalorder %s21, 1
      %p95 = por %p93, %p94
      %p96 = scmp.ne.s32.totalorder %s87, %s88
      %p97 = scmp.eq.s32.totalorder %s21, 0
      %p98 = por %p96, %p97
      %p99 = scmp.ne.s32.totalorder %s87, %s88
      %p100 = scmp.eq.s32.totalorder %s22, 1
      %p101 = por %p99, %p100
      %p103 = scmp.ne.s32.totalorder %s88, %s102
      %p104 = scmp.eq.s32.totalorder %s22, 0
      %p105 = por %p103, %p104
      %s107 = sadd.s32 %s106, 1
      %p110 = scmp.eq.s32.totalorder %s16, 1
      %p111 = scmp.ne.s32.totalorder %s106, %s108
      %p112 = scmp.eq.s32.totalorder %s16, 0
      %p113 = por %p111, %p112
      %p114 = scmp.ne.s32.totalorder %s106, %s108
      %p115 = scmp.eq.s32.totalorder %s21, 1
      %p116 = por %p114, %p115
      %p117 = scmp.ne.s32.totalorder %s108, %s109
      %p118 = scmp.eq.s32.totalorder %s21, 0
      %p119 = por %p117, %p118
      %p120 = scmp.ne.s32.totalorder %s108, %s109
      %p121 = scmp.eq.s32.totalorder %s22, 1
      %p122 = por %p120, %p121
      %p124 = scmp.ne.s32.totalorder %s109, %s123
      %p125 = scmp.eq.s32.totalorder %s22, 0
      %p126 = por %p124, %p125
      %s128 = sadd.s32 %s127, 1
      %p131 = scmp.eq.s32.totalorder %s16, 1
      %p132 = scmp.ne.s32.totalorder %s127, %s129
      %p133 = scmp.eq.s32.totalorder %s16, 0
      %p134 = por %p132, %p133
      %p135 = scmp.ne.s32.totalorder %s127, %s129
      %p136 = scmp.eq.s32.totalorder %s21, 1
      %p137 = por %p135, %p136
      %p138 = scmp.ne.s32.totalorder %s129, %s130
      %p139 = scmp.eq.s32.totalorder %s21, 0
      %p140 = por %p138, %p139
      %p141 = scmp.ne.s32.totalorder %s129, %s130
      %p142 = scmp.eq.s32.totalorder %s22, 1
      %p143 = por %p141, %p142
      %p145 = scmp.ne.s32.totalorder %s130, %s144
      %p146 = scmp.eq.s32.totalorder %s22, 0
      %p147 = por %p145, %p146
      %s149 = sadd.s32 %s148, 1
      %p152 = scmp.eq.s32.totalorder %s16, 1
      %p153 = scmp.ne.s32.totalorder %s148, %s150
      %p154 = scmp.eq.s32.totalorder %s16, 0
      %p155 = por %p153, %p154
      %p156 = scmp.ne.s32.totalorder %s148, %s150
      %p157 = scmp.eq.s32.totalorder %s21, 1
      %p158 = por %p156, %p157
      %p159 = scmp.ne.s32.totalorder %s150, %s151
      %p160 = scmp.eq.s32.totalorder %s21, 0
      %p161 = por %p159, %p160
      %p162 = scmp.ne.s32.totalorder %s150, %s151
      %p163 = scmp.eq.s32.totalorder %s22, 1
      %p164 = por %p162, %p163
      %p166 = scmp.ne.s32.totalorder %s151, %s165
      %p167 = scmp.eq.s32.totalorder %s22, 0
      %p168 = por %p166, %p167
      %s170 = sadd.s32 %s169, 1
      %p173 = scmp.eq.s32.totalorder %s16, 1
      %p174 = scmp.ne.s32.totalorder %s169, %s171
      %p175 = scmp.eq.s32.totalorder %s16, 0
      %p176 = por %p174, %p175
      %p177 = scmp.ne.s32.totalorder %s169, %s171
      %p178 = scmp.eq.s32.totalorder %s21, 1
      %p179 = por %p177, %p178
      %p180 = scmp.ne.s32.totalorder %s171, %s172
      %p181 = scmp.eq.s32.totalorder %s21, 0
      %p182 = por %p180, %p181
      %p183 = scmp.ne.s32.totalorder %s171, %s172
      %p184 = scmp.eq.s32.totalorder %s22, 1
      %p185 = por %p183, %p184
      %p187 = scmp.ne.s32.totalorder %s172, %s186
      %p188 = scmp.eq.s32.totalorder %s22, 0
      %p189 = por %p187, %p188
      %s190 = ssub.s32 %s23, %s35
      %s191 = ssub.s32 %s24, %s31
      %s192 = sor.u32 %s190, %s191
      %p193 = scmp.eq.s32.totalorder %s192, 0
      %s195 = sadd.s32 %s194, 1
      %s196 = scalar_select %p193, %s194, %s195
      %p199 = pneg %p193
      %p200 = scmp.eq.s32.totalorder %s16, 1
      %p201 = por %p199, %p200
      %p202 = scmp.ne.s32.totalorder %s194, %s197
      %p203 = scmp.eq.s32.totalorder %s16, 0
      %p204 = por %p202, %p203
      %p205 = scmp.ne.s32.totalorder %s194, %s197
      %p206 = scmp.eq.s32.totalorder %s21, 1
      %p207 = por %p205, %p206
      %p208 = scmp.ne.s32.totalorder %s197, %s198
      %p209 = scmp.eq.s32.totalorder %s21, 0
      %p210 = por %p208, %p209
      %p211 = scmp.ne.s32.totalorder %s197, %s198
      %p212 = scmp.eq.s32.totalorder %s22, 1
      %p213 = por %p211, %p212
      %p215 = scmp.ne.s32.totalorder %s198, %s214
      %p216 = scmp.eq.s32.totalorder %s22, 0
      %p217 = por %p215, %p216
      %p218 = scmp.le.s32.totalorder 1, %s16
      %p219 = scmp.lt.s32.totalorder %s16, 3
      %p220 = pnand %p218, %p219
      %p221 = pneg %p220
      // Predicated region
      $region9: #{tpu_custom_call.1} parent=5 // pred_check
        _
      $region10: #{tpu_custom_call.1} parent=5 // pred_check_branch
        %223 = sbr.rel (%p220) target = $region12
      $region11: #{tpu_custom_call.1} parent=5 // pred_region
        %s224 = ssub.s32 %s16, 1
        // Predicated region
        $region13: #{tpu_custom_call.1} parent=11 // pred_check
          %p225 = pneg %p77
        $region14: #{tpu_custom_call.1} parent=11 // pred_check_branch
          %227 = sbr.rel (%p225) target = $region16
        $region15: #{tpu_custom_call.1} parent=11 // pred_region
          _
        $region16: #{tpu_custom_call.1} parent=11 // pred_fallthru
          _
        // Predicated region
        $region17: #{tpu_custom_call.1} parent=11 // pred_check
          %p228 = pneg %p98
        $region18: #{tpu_custom_call.1} parent=11 // pred_check_branch
          %230 = sbr.rel (%p228) target = $region20
        $region19: #{tpu_custom_call.1} parent=11 // pred_region
          _
        $region20: #{tpu_custom_call.1} parent=11 // pred_fallthru
          _
        // Predicated region
        $region21: #{tpu_custom_call.1} parent=11 // pred_check
          %p231 = pneg %p119
        $region22: #{tpu_custom_call.1} parent=11 // pred_check_branch
          %233 = sbr.rel (%p231) target = $region24
        $region23: #{tpu_custom_call.1} parent=11 // pred_region
          _
        $region24: #{tpu_custom_call.1} parent=11 // pred_fallthru
          _
        // Predicated region
        $region25: #{tpu_custom_call.1} parent=11 // pred_check
          %p234 = pneg %p140
        $region26: #{tpu_custom_call.1} parent=11 // pred_check_branch
          %236 = sbr.rel (%p234) target = $region28
        $region27: #{tpu_custom_call.1} parent=11 // pred_region
          _
        $region28: #{tpu_custom_call.1} parent=11 // pred_fallthru
          _
        // Predicated region
        $region29: #{tpu_custom_call.1} parent=11 // pred_check
          %p237 = pneg %p161
        $region30: #{tpu_custom_call.1} parent=11 // pred_check_branch
          %239 = sbr.rel (%p237) target = $region32
        $region31: #{tpu_custom_call.1} parent=11 // pred_region
          _
        $region32: #{tpu_custom_call.1} parent=11 // pred_fallthru
          _
        // Predicated region
        $region33: #{tpu_custom_call.1} parent=11 // pred_check
          %p240 = pneg %p182
        $region34: #{tpu_custom_call.1} parent=11 // pred_check_branch
          %242 = sbr.rel (%p240) target = $region36
        $region35: #{tpu_custom_call.1} parent=11 // pred_region
          _
        $region36: #{tpu_custom_call.1} parent=11 // pred_fallthru
          _
      $region12: #{tpu_custom_call.1} parent=5 // pred_fallthru
        _
      %p243 = scmp.lt.s32.totalorder %s16, 2
      // Predicated region
      $region37: #{tpu_custom_call.1} parent=5 // pred_check
        %p244 = pneg %p243
      $region38: #{tpu_custom_call.1} parent=5 // pred_check_branch
        %246 = sbr.rel (%p244) target = $region40
      $region39: #{tpu_custom_call.1} parent=5 // pred_region
        // Predicated region
        $region41: #{tpu_custom_call.1} parent=39 // pred_check
          %p247 = pneg %p50
        $region42: #{tpu_custom_call.1} parent=39 // pred_check_branch
          %249 = sbr.rel (%p247) target = $region44
        $region43: #{tpu_custom_call.1} parent=39 // pred_region
          %p250 = scmp.lt.s32.totalorder %s23, 0
          %s251 = scalar_select %p250, %s23, 0
          %p252 = scmp.lt.s32.totalorder %s24, 1
          %s253 = scalar_select %p252, %s24, 1
          %s254 = smul.addr %s251, 2
          %s255 = sadd.s32 %s253, %s254
          %s256 = smul.addr %s255, 8
          %s257 = scalar_lea.vmem %s0, %s256
        $region44: #{tpu_custom_call.1} parent=39 // pred_fallthru
          _
      $region40: #{tpu_custom_call.1} parent=5 // pred_fallthru
        _
      %p258 = scmp.le.s32.totalorder 1, %s16
      %p259 = scmp.lt.s32.totalorder %s16, 3
      %p260 = pnand %p258, %p259
      %p261 = pneg %p260
      // Predicated region
      $region45: #{tpu_custom_call.1} parent=5 // pred_check
        _
      $region46: #{tpu_custom_call.1} parent=5 // pred_check_branch
        %263 = sbr.rel (%p260) target = $region48
      $region47: #{tpu_custom_call.1} parent=5 // pred_region
        %s264 = ssub.s32 %s16, 1
        %p265 = scmp.lt.s32.totalorder %s25, 0
        %s266 = scalar_select %p265, %s25, 0
        %p267 = scmp.lt.s32.totalorder %s26, 1
        %s268 = scalar_select %p267, %s26, 1
        %s269 = smul.addr %s266, 2
        %s270 = sadd.s32 %s268, %s269
        %s271 = smul.addr %s270, 8
        %s272 = scalar_lea.vmem %s0, %s271
        %p273 = pneg %p56
        %p274 = pneg %p53
        %p275 = pneg %p77
        %p276 = pneg %p74
        %p277 = pneg %p98
        %p278 = pneg %p95
        %p279 = pneg %p119
        %p280 = pneg %p116
        %p281 = pneg %p140
        %p282 = pneg %p137
        %p283 = pneg %p161
        %p284 = pneg %p158
        %p285 = pneg %p182
        %p286 = pneg %p179
        %p287 = pneg %p210
        %p288 = pneg %p207
        %s289 = sand.u32 %s197, 1
        %s290 = scalar_lea.sflag [#allocation3], %s289
        %s291 = sand.u32 %s197, 1
        %s292 = smul.addr %s291, 8
        %s293 = scalar_lea.vmem [#allocation2], %s292
        %p294 = scmp.lt.s32.totalorder %s25, 0
        %s295 = scalar_select %p294, %s25, 0
        %p296 = scmp.lt.s32.totalorder %s26, 1
        %s297 = scalar_select %p296, %s26, 1
        %s298 = smul.addr %s295, 2
        %s299 = sadd.s32 %s297, %s298
        %s300 = smul.addr %s299, 8
        %s301 = scalar_lea.vmem %s0, %s300
        %v302 = vld [vmem:[%s301] sm:$0xff]
        %v303 = vld [vmem:[%s5] sm:$0xff]
        %v304 = vld [vmem:[%s5 + $0x8] sm:$0xff]
        %v305 = vld [vmem:[%s5 + $0x10] sm:$0xff]
        %v306 = vld [vmem:[%s5 + $0x18] sm:$0xff]
        %v307 = vld [vmem:[%s5 + $0x20] sm:$0xff]
        %v308 = vld [vmem:[%s5 + $0x28] sm:$0xff]
        %v309 = vld [vmem:[%s5 + $0x30] sm:$0xff]
        %v310 = vld [vmem:[%s5 + $0x38] sm:$0xff]
        %v311 = vld [vmem:[%s5 + $0x40] sm:$0xff]
        %v312 = vld [vmem:[%s5 + $0x48] sm:$0xff]
        %v313 = vld [vmem:[%s5 + $0x50] sm:$0xff]
        %v314 = vld [vmem:[%s5 + $0x58] sm:$0xff]
        %v315 = vld [vmem:[%s5 + $0x60] sm:$0xff]
        %v316 = vld [vmem:[%s5 + $0x68] sm:$0xff]
        %v317 = vld [vmem:[%s5 + $0x70] sm:$0xff]
        %v318 = vld [vmem:[%s5 + $0x78] sm:$0xff]
        %319 = vmatprep.subr.mxu0 0.0
        %v320 = vand.u32 %v303, 4294901760
        %321 = vmatpush1.msra.mxu0 %v320
        %322 = vmatprep.subr.mxu0 0.0
        %v323 = vand.u32 %v304, 4294901760
        %324 = vmatpush1.msra.mxu0 %v323
        %325 = vmatprep.subr.mxu0 0.0
        %v326 = vand.u32 %v305, 4294901760
        %327 = vmatpush1.msra.mxu0 %v326
        %328 = vmatprep.subr.mxu0 0.0
        %v329 = vand.u32 %v306, 4294901760
        %330 = vmatpush1.msra.mxu0 %v329
        %331 = vmatprep.subr.mxu0 0.0
        %v332 = vand.u32 %v307, 4294901760
        %333 = vmatpush1.msra.mxu0 %v332
        %334 = vmatprep.subr.mxu0 0.0
        %v335 = vand.u32 %v308, 4294901760
        %336 = vmatpush1.msra.mxu0 %v335
        %337 = vmatprep.subr.mxu0 0.0
        %v338 = vand.u32 %v309, 4294901760
        %339 = vmatpush1.msra.mxu0 %v338
        %340 = vmatprep.subr.mxu0 0.0
        %v341 = vand.u32 %v310, 4294901760
        %342 = vmatpush1.msra.mxu0 %v341
        %343 = vmatprep.subr.mxu0 0.0
        %v344 = vand.u32 %v311, 4294901760
        %345 = vmatpush1.msra.mxu0 %v344
        %346 = vmatprep.subr.mxu0 0.0
        %v347 = vand.u32 %v312, 4294901760
        %348 = vmatpush1.msra.mxu0 %v347
        %349 = vmatprep.subr.mxu0 0.0
        %v350 = vand.u32 %v313, 4294901760
        %351 = vmatpush1.msra.mxu0 %v350
        %352 = vmatprep.subr.mxu0 0.0
        %v353 = vand.u32 %v314, 4294901760
        %354 = vmatpush1.msra.mxu0 %v353
        %355 = vmatprep.subr.mxu0 0.0
        %v356 = vand.u32 %v315, 4294901760
        %357 = vmatpush1.msra.mxu0 %v356
        %358 = vmatprep.subr.mxu0 0.0
        %v359 = vand.u32 %v316, 4294901760
        %360 = vmatpush1.msra.mxu0 %v359
        %361 = vmatprep.subr.mxu0 0.0
        %v362 = vand.u32 %v317, 4294901760
        %363 = vmatpush1.msra.mxu0 %v362
        %364 = vmatprep.subr.mxu0 0.0
        %v365 = vand.u32 %v318, 4294901760
        %366 = vmatpush1.msra.mxu0 %v365
        %367 = vmatprep.subr.mxu0 0.0
        %368 = vmatpush1.msra.mxu0 0.0
        %369 = vmatprep.subr.mxu0 0.0
        %370 = vmatpush1.msra.mxu0 0.0
        %371 = vmatprep.subr.mxu0 0.0
        %372 = vmatpush1.msra.mxu0 0.0
        %373 = vmatprep.subr.mxu0 0.0
        %374 = vmatpush1.msra.mxu0 0.0
        %375 = vmatprep.subr.mxu0 0.0
        %376 = vmatpush1.msra.mxu0 0.0
        %377 = vmatprep.subr.mxu0 0.0
        %378 = vmatpush1.msra.mxu0 0.0
        %379 = vmatprep.subr.mxu0 0.0
        %380 = vmatpush1.msra.mxu0 0.0
        %381 = vmatprep.subr.mxu0 0.0
        %382 = vmatpush1.msra.mxu0 0.0
        %383 = vmatprep.subr.mxu0 0.0
        %384 = vmatpush1.msra.mxu0 0.0
        %385 = vmatprep.subr.mxu0 0.0
        %386 = vmatpush1.msra.mxu0 0.0
        %387 = vmatprep.subr.mxu0 0.0
        %388 = vmatpush1.msra.mxu0 0.0
        %389 = vmatprep.subr.mxu0 0.0
        %390 = vmatpush1.msra.mxu0 0.0
        %391 = vmatprep.subr.mxu0 0.0
        %392 = vmatpush1.msra.mxu0 0.0
        %393 = vmatprep.subr.mxu0 0.0
        %394 = vmatpush1.msra.mxu0 0.0
        %395 = vmatprep.subr.mxu0 0.0
        %396 = vmatpush1.msra.mxu0 0.0
        %397 = vmatprep.subr.mxu0 0.0
        %398 = vmatpush1.msra.mxu0 0.0
        %399 = vmatprep.mubr.f32.mxu0 0.0
        %v400 = vand.u32 %v302, 4294901760
        %v401 = vsub.f32 %v302, %v400
        %v402 = vand.u32 %v401, 4294901760
        %v403 = vsub.f32 %v401, %v402
        %v404 = vand.u32 %v403, 4294901760
        %405 = vmatmul.mubr.f32.gmra.mrb[0].mxu0 %v404
        %v406 = vpop.f32.mrb[0].mxu0
        %v407 = vadd.f32 0.0, %v406
        %v408 = vpop.f32.mrb[0].mxu0
        %409 = vdwg.mxu0
        %410 = vmatprep.subr.mxu0 0.0
        %v411 = vand.u32 %v303, 4294901760
        %v412 = vsub.f32 %v303, %v411
        %v413 = vand.u32 %v412, 4294901760
        %v414 = vsub.f32 %v412, %v413
        %v415 = vand.u32 %v414, 4294901760
        %416 = vmatpush1.msra.mxu0 %v415
        %417 = vmatprep.subr.mxu0 0.0
        %v418 = vand.u32 %v304, 4294901760
        %v419 = vsub.f32 %v304, %v418
        %v420 = vand.u32 %v419, 4294901760
        %v421 = vsub.f32 %v419, %v420
        %v422 = vand.u32 %v421, 4294901760
        %423 = vmatpush1.msra.mxu0 %v422
        %424 = vmatprep.subr.mxu0 0.0
        %v425 = vand.u32 %v305, 4294901760
        %v426 = vsub.f32 %v305, %v425
        %v427 = vand.u32 %v426, 4294901760
        %v428 = vsub.f32 %v426, %v427
        %v429 = vand.u32 %v428, 4294901760
        %430 = vmatpush1.msra.mxu0 %v429
        %431 = vmatprep.subr.mxu0 0.0
        %v432 = vand.u32 %v306, 4294901760
        %v433 = vsub.f32 %v306, %v432
        %v434 = vand.u32 %v433, 4294901760
        %v435 = vsub.f32 %v433, %v434
        %v436 = vand.u32 %v435, 4294901760
        %437 = vmatpush1.msra.mxu0 %v436
        %438 = vmatprep.subr.mxu0 0.0
        %v439 = vand.u32 %v307, 4294901760
        %v440 = vsub.f32 %v307, %v439
        %v441 = vand.u32 %v440, 4294901760
        %v442 = vsub.f32 %v440, %v441
        %v443 = vand.u32 %v442, 4294901760
        %444 = vmatpush1.msra.mxu0 %v443
        %445 = vmatprep.subr.mxu0 0.0
        %v446 = vand.u32 %v308, 4294901760
        %v447 = vsub.f32 %v308, %v446
        %v448 = vand.u32 %v447, 4294901760
        %v449 = vsub.f32 %v447, %v448
        %v450 = vand.u32 %v449, 4294901760
        %451 = vmatpush1.msra.mxu0 %v450
        %452 = vmatprep.subr.mxu0 0.0
        %v453 = vand.u32 %v309, 4294901760
        %v454 = vsub.f32 %v309, %v453
        %v455 = vand.u32 %v454, 4294901760
        %v456 = vsub.f32 %v454, %v455
        %v457 = vand.u32 %v456, 4294901760
        %458 = vmatpush1.msra.mxu0 %v457
        %459 = vmatprep.subr.mxu0 0.0
        %v460 = vand.u32 %v310, 4294901760
        %v461 = vsub.f32 %v310, %v460
        %v462 = vand.u32 %v461, 4294901760
        %v463 = vsub.f32 %v461, %v462
        %v464 = vand.u32 %v463, 4294901760
        %465 = vmatpush1.msra.mxu0 %v464
        %466 = vmatprep.subr.mxu0 0.0
        %v467 = vand.u32 %v311, 4294901760
        %v468 = vsub.f32 %v311, %v467
        %v469 = vand.u32 %v468, 4294901760
        %v470 = vsub.f32 %v468, %v469
        %v471 = vand.u32 %v470, 4294901760
        %472 = vmatpush1.msra.mxu0 %v471
        %473 = vmatprep.subr.mxu0 0.0
        %v474 = vand.u32 %v312, 4294901760
        %v475 = vsub.f32 %v312, %v474
        %v476 = vand.u32 %v475, 4294901760
        %v477 = vsub.f32 %v475, %v476
        %v478 = vand.u32 %v477, 4294901760
        %479 = vmatpush1.msra.mxu0 %v478
        %480 = vmatprep.subr.mxu0 0.0
        %v481 = vand.u32 %v313, 4294901760
        %v482 = vsub.f32 %v313, %v481
        %v483 = vand.u32 %v482, 4294901760
        %v484 = vsub.f32 %v482, %v483
        %v485 = vand.u32 %v484, 4294901760
        %486 = vmatpush1.msra.mxu0 %v485
        %487 = vmatprep.subr.mxu0 0.0
        %v488 = vand.u32 %v314, 4294901760
        %v489 = vsub.f32 %v314, %v488
        %v490 = vand.u32 %v489, 4294901760
        %v491 = vsub.f32 %v489, %v490
        %v492 = vand.u32 %v491, 4294901760
        %493 = vmatpush1.msra.mxu0 %v492
        %494 = vmatprep.subr.mxu0 0.0
        %v495 = vand.u32 %v315, 4294901760
        %v496 = vsub.f32 %v315, %v495
        %v497 = vand.u32 %v496, 4294901760
        %v498 = vsub.f32 %v496, %v497
        %v499 = vand.u32 %v498, 4294901760
        %500 = vmatpush1.msra.mxu0 %v499
        %501 = vmatprep.subr.mxu0 0.0
        %v502 = vand.u32 %v316, 4294901760
        %v503 = vsub.f32 %v316, %v502
        %v504 = vand.u32 %v503, 4294901760
        %v505 = vsub.f32 %v503, %v504
        %v506 = vand.u32 %v505, 4294901760
        %507 = vmatpush1.msra.mxu0 %v506
        %508 = vmatprep.subr.mxu0 0.0
        %v509 = vand.u32 %v317, 4294901760
        %v510 = vsub.f32 %v317, %v509
        %v511 = vand.u32 %v510, 4294901760
        %v512 = vsub.f32 %v510, %v511
        %v513 = vand.u32 %v512, 4294901760
        %514 = vmatpush1.msra.mxu0 %v513
        %515 = vmatprep.subr.mxu0 0.0
        %v516 = vand.u32 %v318, 4294901760
        %v517 = vsub.f32 %v318, %v516
        %v518 = vand.u32 %v517, 4294901760
        %v519 = vsub.f32 %v517, %v518
        %v520 = vand.u32 %v519, 4294901760
        %521 = vmatpush1.msra.mxu0 %v520
        %522 = vmatprep.subr.mxu0 0.0
        %523 = vmatpush1.msra.mxu0 0.0
        %524 = vmatprep.subr.mxu0 0.0
        %525 = vmatpush1.msra.mxu0 0.0
        %526 = vmatprep.subr.mxu0 0.0
        %527 = vmatpush1.msra.mxu0 0.0
        %528 = vmatprep.subr.mxu0 0.0
        %529 = vmatpush1.msra.mxu0 0.0
        %530 = vmatprep.subr.mxu0 0.0
        %531 = vmatpush1.msra.mxu0 0.0
        %532 = vmatprep.subr.mxu0 0.0
        %533 = vmatpush1.msra.mxu0 0.0
        %534 = vmatprep.subr.mxu0 0.0
        %535 = vmatpush1.msra.mxu0 0.0
        %536 = vmatprep.subr.mxu0 0.0
        %537 = vmatpush1.msra.mxu0 0.0
        %538 = vmatprep.subr.mxu0 0.0
        %539 = vmatpush1.msra.mxu0 0.0
        %540 = vmatprep.subr.mxu0 0.0
        %541 = vmatpush1.msra.mxu0 0.0
        %542 = vmatprep.subr.mxu0 0.0
        %543 = vmatpush1.msra.mxu0 0.0
        %544 = vmatprep.subr.mxu0 0.0
        %545 = vmatpush1.msra.mxu0 0.0
        %546 = vmatprep.subr.mxu0 0.0
        %547 = vmatpush1.msra.mxu0 0.0
        %548 = vmatprep.subr.mxu0 0.0
        %549 = vmatpush1.msra.mxu0 0.0
        %550 = vmatprep.subr.mxu0 0.0
        %551 = vmatpush1.msra.mxu0 0.0
        %552 = vmatprep.subr.mxu0 0.0
        %553 = vmatpush1.msra.mxu0 0.0
        %554 = vmatprep.mubr.f32.mxu0 0.0
        %v555 = vand.u32 %v302, 4294901760
        %556 = vmatmul.mubr.f32.gmra.mrb[0].mxu0 %v555
        %v557 = vpop.f32.mrb[0].mxu0
        %v558 = vadd.f32 %v407, %v557
        %v559 = vpop.f32.mrb[0].mxu0
        %560 = vdwg.mxu0
        %561 = vmatprep.subr.mxu0 0.0
        %v562 = vand.u32 %v303, 4294901760
        %v563 = vsub.f32 %v303, %v562
        %564 = vmatpush1.msra.mxu0 %v563
        %565 = vmatprep.subr.mxu0 0.0
        %v566 = vand.u32 %v304, 4294901760
        %v567 = vsub.f32 %v304, %v566
        %568 = vmatpush1.msra.mxu0 %v567
        %569 = vmatprep.subr.mxu0 0.0
        %v570 = vand.u32 %v305, 4294901760
        %v571 = vsub.f32 %v305, %v570
        %572 = vmatpush1.msra.mxu0 %v571
        %573 = vmatprep.subr.mxu0 0.0
        %v574 = vand.u32 %v306, 4294901760
        %v575 = vsub.f32 %v306, %v574
        %576 = vmatpush1.msra.mxu0 %v575
        %577 = vmatprep.subr.mxu0 0.0
        %v578 = vand.u32 %v307, 4294901760
        %v579 = vsub.f32 %v307, %v578
        %580 = vmatpush1.msra.mxu0 %v579
        %581 = vmatprep.subr.mxu0 0.0
        %v582 = vand.u32 %v308, 4294901760
        %v583 = vsub.f32 %v308, %v582
        %584 = vmatpush1.msra.mxu0 %v583
        %585 = vmatprep.subr.mxu0 0.0
        %v586 = vand.u32 %v309, 4294901760
        %v587 = vsub.f32 %v309, %v586
        %588 = vmatpush1.msra.mxu0 %v587
        %589 = vmatprep.subr.mxu0 0.0
        %v590 = vand.u32 %v310, 4294901760
        %v591 = vsub.f32 %v310, %v590
        %592 = vmatpush1.msra.mxu0 %v591
        %593 = vmatprep.subr.mxu0 0.0
        %v594 = vand.u32 %v311, 4294901760
        %v595 = vsub.f32 %v311, %v594
        %596 = vmatpush1.msra.mxu0 %v595
        %597 = vmatprep.subr.mxu0 0.0
        %v598 = vand.u32 %v312, 4294901760
        %v599 = vsub.f32 %v312, %v598
        %600 = vmatpush1.msra.mxu0 %v599
        %601 = vmatprep.subr.mxu0 0.0
        %v602 = vand.u32 %v313, 4294901760
        %v603 = vsub.f32 %v313, %v602
        %604 = vmatpush1.msra.mxu0 %v603
        %605 = vmatprep.subr.mxu0 0.0
        %v606 = vand.u32 %v314, 4294901760
        %v607 = vsub.f32 %v314, %v606
        %608 = vmatpush1.msra.mxu0 %v607
        %609 = vmatprep.subr.mxu0 0.0
        %v610 = vand.u32 %v315, 4294901760
        %v611 = vsub.f32 %v315, %v610
        %612 = vmatpush1.msra.mxu0 %v611
        %613 = vmatprep.subr.mxu0 0.0
        %v614 = vand.u32 %v316, 4294901760
        %v615 = vsub.f32 %v316, %v614
        %616 = vmatpush1.msra.mxu0 %v615
        %617 = vmatprep.subr.mxu0 0.0
        %v618 = vand.u32 %v317, 4294901760
        %v619 = vsub.f32 %v317, %v618
        %620 = vmatpush1.msra.mxu0 %v619
        %621 = vmatprep.subr.mxu0 0.0
        %v622 = vand.u32 %v318, 4294901760
        %v623 = vsub.f32 %v318, %v622
        %624 = vmatpush1.msra.mxu0 %v623
        %625 = vmatprep.subr.mxu0 0.0
        %626 = vmatpush1.msra.mxu0 0.0
        %627 = vmatprep.subr.mxu0 0.0
        %628 = vmatpush1.msra.mxu0 0.0
        %629 = vmatprep.subr.mxu0 0.0
        %630 = vmatpush1.msra.mxu0 0.0
        %631 = vmatprep.subr.mxu0 0.0
        %632 = vmatpush1.msra.mxu0 0.0
        %633 = vmatprep.subr.mxu0 0.0
        %634 = vmatpush1.msra.mxu0 0.0
        %635 = vmatprep.subr.mxu0 0.0
        %636 = vmatpush1.msra.mxu0 0.0
        %637 = vmatprep.subr.mxu0 0.0
        %638 = vmatpush1.msra.mxu0 0.0
        %639 = vmatprep.subr.mxu0 0.0
        %640 = vmatpush1.msra.mxu0 0.0
        %641 = vmatprep.subr.mxu0 0.0
        %642 = vmatpush1.msra.mxu0 0.0
        %643 = vmatprep.subr.mxu0 0.0
        %644 = vmatpush1.msra.mxu0 0.0
        %645 = vmatprep.subr.mxu0 0.0
        %646 = vmatpush1.msra.mxu0 0.0
        %647 = vmatprep.subr.mxu0 0.0
        %648 = vmatpush1.msra.mxu0 0.0
        %649 = vmatprep.subr.mxu0 0.0
        %650 = vmatpush1.msra.mxu0 0.0
        %651 = vmatprep.subr.mxu0 0.0
        %652 = vmatpush1.msra.mxu0 0.0
        %653 = vmatprep.subr.mxu0 0.0
        %654 = vmatpush1.msra.mxu0 0.0
        %655 = vmatprep.subr.mxu0 0.0
        %656 = vmatpush1.msra.mxu0 0.0
        %657 = vmatprep.mubr.f32.mxu0 0.0
        %v658 = vand.u32 %v302, 4294901760
        %v659 = vsub.f32 %v302, %v658
        %660 = vmatmul.mubr.f32.gmra.mrb[0].mxu0 %v659
        %v661 = vpop.f32.mrb[0].mxu0
        %v662 = vadd.f32 %v558, %v661
        %v663 = vpop.f32.mrb[0].mxu0
        %664 = vdwg.mxu0
        %665 = vmatprep.subr.mxu0 0.0
        %v666 = vand.u32 %v303, 4294901760
        %667 = vmatpush1.msra.mxu0 %v666
        %668 = vmatprep.subr.mxu0 0.0
        %v669 = vand.u32 %v304, 4294901760
        %670 = vmatpush1.msra.mxu0 %v669
        %671 = vmatprep.subr.mxu0 0.0
        %v672 = vand.u32 %v305, 4294901760
        %673 = vmatpush1.msra.mxu0 %v672
        %674 = vmatprep.subr.mxu0 0.0
        %v675 = vand.u32 %v306, 4294901760
        %676 = vmatpush1.msra.mxu0 %v675
        %677 = vmatprep.subr.mxu0 0.0
        %v678 = vand.u32 %v307, 4294901760
        %679 = vmatpush1.msra.mxu0 %v678
        %680 = vmatprep.subr.mxu0 0.0
        %v681 = vand.u32 %v308, 4294901760
        %682 = vmatpush1.msra.mxu0 %v681
        %683 = vmatprep.subr.mxu0 0.0
        %v684 = vand.u32 %v309, 4294901760
        %685 = vmatpush1.msra.mxu0 %v684
        %686 = vmatprep.subr.mxu0 0.0
        %v687 = vand.u32 %v310, 4294901760
        %688 = vmatpush1.msra.mxu0 %v687
        %689 = vmatprep.subr.mxu0 0.0
        %v690 = vand.u32 %v311, 4294901760
        %691 = vmatpush1.msra.mxu0 %v690
        %692 = vmatprep.subr.mxu0 0.0
        %v693 = vand.u32 %v312, 4294901760
        %694 = vmatpush1.msra.mxu0 %v693
        %695 = vmatprep.subr.mxu0 0.0
        %v696 = vand.u32 %v313, 4294901760
        %697 = vmatpush1.msra.mxu0 %v696
        %698 = vmatprep.subr.mxu0 0.0
        %v699 = vand.u32 %v314, 4294901760
        %700 = vmatpush1.msra.mxu0 %v699
        %701 = vmatprep.subr.mxu0 0.0
        %v702 = vand.u32 %v315, 4294901760
        %703 = vmatpush1.msra.mxu0 %v702
        %704 = vmatprep.subr.mxu0 0.0
        %v705 = vand.u32 %v316, 4294901760
        %706 = vmatpush1.msra.mxu0 %v705
        %707 = vmatprep.subr.mxu0 0.0
        %v708 = vand.u32 %v317, 4294901760
        %709 = vmatpush1.msra.mxu0 %v708
        %710 = vmatprep.subr.mxu0 0.0
        %v711 = vand.u32 %v318, 4294901760
        %712 = vmatpush1.msra.mxu0 %v711
        %713 = vmatprep.subr.mxu0 0.0
        %714 = vmatpush1.msra.mxu0 0.0
        %715 = vmatprep.subr.mxu0 0.0
        %716 = vmatpush1.msra.mxu0 0.0
        %717 = vmatprep.subr.mxu0 0.0
        %718 = vmatpush1.msra.mxu0 0.0
        %719 = vmatprep.subr.mxu0 0.0
        %720 = vmatpush1.msra.mxu0 0.0
        %721 = vmatprep.subr.mxu0 0.0
        %722 = vmatpush1.msra.mxu0 0.0
        %723 = vmatprep.subr.mxu0 0.0
        %724 = vmatpush1.msra.mxu0 0.0
        %725 = vmatprep.subr.mxu0 0.0
        %726 = vmatpush1.msra.mxu0 0.0
        %727 = vmatprep.subr.mxu0 0.0
        %728 = vmatpush1.msra.mxu0 0.0
        %729 = vmatprep.subr.mxu0 0.0
        %730 = vmatpush1.msra.mxu0 0.0
        %731 = vmatprep.subr.mxu0 0.0
        %732 = vmatpush1.msra.mxu0 0.0
        %733 = vmatprep.subr.mxu0 0.0
        %734 = vmatpush1.msra.mxu0 0.0
        %735 = vmatprep.subr.mxu0 0.0
        %736 = vmatpush1.msra.mxu0 0.0
        %737 = vmatprep.subr.mxu0 0.0
        %738 = vmatpush1.msra.mxu0 0.0
        %739 = vmatprep.subr.mxu0 0.0
        %740 = vmatpush1.msra.mxu0 0.0
        %741 = vmatprep.subr.mxu0 0.0
        %742 = vmatpush1.msra.mxu0 0.0
        %743 = vmatprep.subr.mxu0 0.0
        %744 = vmatpush1.msra.mxu0 0.0
        %745 = vmatprep.mubr.f32.mxu0 0.0
        %v746 = vand.u32 %v302, 4294901760
        %v747 = vsub.f32 %v302, %v746
        %v748 = vand.u32 %v747, 4294901760
        %749 = vmatmul.mubr.f32.gmra.mrb[0].mxu0 %v748
        %v750 = vpop.f32.mrb[0].mxu0
        %v751 = vadd.f32 %v662, %v750
        %v752 = vpop.f32.mrb[0].mxu0
        %753 = vdwg.mxu0
        %754 = vmatprep.subr.mxu0 0.0
        %v755 = vand.u32 %v303, 4294901760
        %v756 = vsub.f32 %v303, %v755
        %v757 = vand.u32 %v756, 4294901760
        %758 = vmatpush1.msra.mxu0 %v757
        %759 = vmatprep.subr.mxu0 0.0
        %v760 = vand.u32 %v304, 4294901760
        %v761 = vsub.f32 %v304, %v760
        %v762 = vand.u32 %v761, 4294901760
        %763 = vmatpush1.msra.mxu0 %v762
        %764 = vmatprep.subr.mxu0 0.0
        %v765 = vand.u32 %v305, 4294901760
        %v766 = vsub.f32 %v305, %v765
        %v767 = vand.u32 %v766, 4294901760
        %768 = vmatpush1.msra.mxu0 %v767
        %769 = vmatprep.subr.mxu0 0.0
        %v770 = vand.u32 %v306, 4294901760
        %v771 = vsub.f32 %v306, %v770
        %v772 = vand.u32 %v771, 4294901760
        %773 = vmatpush1.msra.mxu0 %v772
        %774 = vmatprep.subr.mxu0 0.0
        %v775 = vand.u32 %v307, 4294901760
        %v776 = vsub.f32 %v307, %v775
        %v777 = vand.u32 %v776, 4294901760
        %778 = vmatpush1.msra.mxu0 %v777
        %779 = vmatprep.subr.mxu0 0.0
        %v780 = vand.u32 %v308, 4294901760
        %v781 = vsub.f32 %v308, %v780
        %v782 = vand.u32 %v781, 4294901760
        %783 = vmatpush1.msra.mxu0 %v782
        %784 = vmatprep.subr.mxu0 0.0
        %v785 = vand.u32 %v309, 4294901760
        %v786 = vsub.f32 %v309, %v785
        %v787 = vand.u32 %v786, 4294901760
        %788 = vmatpush1.msra.mxu0 %v787
        %789 = vmatprep.subr.mxu0 0.0
        %v790 = vand.u32 %v310, 4294901760
        %v791 = vsub.f32 %v310, %v790
        %v792 = vand.u32 %v791, 4294901760
        %793 = vmatpush1.msra.mxu0 %v792
        %794 = vmatprep.subr.mxu0 0.0
        %v795 = vand.u32 %v311, 4294901760
        %v796 = vsub.f32 %v311, %v795
        %v797 = vand.u32 %v796, 4294901760
        %798 = vmatpush1.msra.mxu0 %v797
        %799 = vmatprep.subr.mxu0 0.0
        %v800 = vand.u32 %v312, 4294901760
        %v801 = vsub.f32 %v312, %v800
        %v802 = vand.u32 %v801, 4294901760
        %803 = vmatpush1.msra.mxu0 %v802
        %804 = vmatprep.subr.mxu0 0.0
        %v805 = vand.u32 %v313, 4294901760
        %v806 = vsub.f32 %v313, %v805
        %v807 = vand.u32 %v806, 4294901760
        %808 = vmatpush1.msra.mxu0 %v807
        %809 = vmatprep.subr.mxu0 0.0
        %v810 = vand.u32 %v314, 4294901760
        %v811 = vsub.f32 %v314, %v810
        %v812 = vand.u32 %v811, 4294901760
        %813 = vmatpush1.msra.mxu0 %v812
        %814 = vmatprep.subr.mxu0 0.0
        %v815 = vand.u32 %v315, 4294901760
        %v816 = vsub.f32 %v315, %v815
        %v817 = vand.u32 %v816, 4294901760
        %818 = vmatpush1.msra.mxu0 %v817
        %819 = vmatprep.subr.mxu0 0.0
        %v820 = vand.u32 %v316, 4294901760
        %v821 = vsub.f32 %v316, %v820
        %v822 = vand.u32 %v821, 4294901760
        %823 = vmatpush1.msra.mxu0 %v822
        %824 = vmatprep.subr.mxu0 0.0
        %v825 = vand.u32 %v317, 4294901760
        %v826 = vsub.f32 %v317, %v825
        %v827 = vand.u32 %v826, 4294901760
        %828 = vmatpush1.msra.mxu0 %v827
        %829 = vmatprep.subr.mxu0 0.0
        %v830 = vand.u32 %v318, 4294901760
        %v831 = vsub.f32 %v318, %v830
        %v832 = vand.u32 %v831, 4294901760
        %833 = vmatpush1.msra.mxu0 %v832
        %834 = vmatprep.subr.mxu0 0.0
        %835 = vmatpush1.msra.mxu0 0.0
        %836 = vmatprep.subr.mxu0 0.0
        %837 = vmatpush1.msra.mxu0 0.0
        %838 = vmatprep.subr.mxu0 0.0
        %839 = vmatpush1.msra.mxu0 0.0
        %840 = vmatprep.subr.mxu0 0.0
        %841 = vmatpush1.msra.mxu0 0.0
        %842 = vmatprep.subr.mxu0 0.0
        %843 = vmatpush1.msra.mxu0 0.0
        %844 = vmatprep.subr.mxu0 0.0
        %845 = vmatpush1.msra.mxu0 0.0
        %846 = vmatprep.subr.mxu0 0.0
        %847 = vmatpush1.msra.mxu0 0.0
        %848 = vmatprep.subr.mxu0 0.0
        %849 = vmatpush1.msra.mxu0 0.0
        %850 = vmatprep.subr.mxu0 0.0
        %851 = vmatpush1.msra.mxu0 0.0
        %852 = vmatprep.subr.mxu0 0.0
        %853 = vmatpush1.msra.mxu0 0.0
        %854 = vmatprep.subr.mxu0 0.0
        %855 = vmatpush1.msra.mxu0 0.0
        %856 = vmatprep.subr.mxu0 0.0
        %857 = vmatpush1.msra.mxu0 0.0
        %858 = vmatprep.subr.mxu0 0.0
        %859 = vmatpush1.msra.mxu0 0.0
        %860 = vmatprep.subr.mxu0 0.0
        %861 = vmatpush1.msra.mxu0 0.0
        %862 = vmatprep.subr.mxu0 0.0
        %863 = vmatpush1.msra.mxu0 0.0
        %864 = vmatprep.subr.mxu0 0.0
        %865 = vmatpush1.msra.mxu0 0.0
        %866 = vmatprep.mubr.f32.mxu0 0.0
        %v867 = vand.u32 %v302, 4294901760
        %868 = vmatmul.mubr.f32.gmra.mrb[0].mxu0 %v867
        %v869 = vpop.f32.mrb[0].mxu0
        %v870 = vadd.f32 %v751, %v869
        %v871 = vpop.f32.mrb[0].mxu0
        %872 = vdwg.mxu0
        %873 = vmatprep.subr.mxu0 0.0
        %v874 = vand.u32 %v303, 4294901760
        %875 = vmatpush1.msra.mxu0 %v874
        %876 = vmatprep.subr.mxu0 0.0
        %v877 = vand.u32 %v304, 4294901760
        %878 = vmatpush1.msra.mxu0 %v877
        %879 = vmatprep.subr.mxu0 0.0
        %v880 = vand.u32 %v305, 4294901760
        %881 = vmatpush1.msra.mxu0 %v880
        %882 = vmatprep.subr.mxu0 0.0
        %v883 = vand.u32 %v306, 4294901760
        %884 = vmatpush1.msra.mxu0 %v883
        %885 = vmatprep.subr.mxu0 0.0
        %v886 = vand.u32 %v307, 4294901760
        %887 = vmatpush1.msra.mxu0 %v886
        %888 = vmatprep.subr.mxu0 0.0
        %v889 = vand.u32 %v308, 4294901760
        %890 = vmatpush1.msra.mxu0 %v889
        %891 = vmatprep.subr.mxu0 0.0
        %v892 = vand.u32 %v309, 4294901760
        %893 = vmatpush1.msra.mxu0 %v892
        %894 = vmatprep.subr.mxu0 0.0
        %v895 = vand.u32 %v310, 4294901760
        %896 = vmatpush1.msra.mxu0 %v895
        %897 = vmatprep.subr.mxu0 0.0
        %v898 = vand.u32 %v311, 4294901760
        %899 = vmatpush1.msra.mxu0 %v898
        %900 = vmatprep.subr.mxu0 0.0
        %v901 = vand.u32 %v312, 4294901760
        %902 = vmatpush1.msra.mxu0 %v901
        %903 = vmatprep.subr.mxu0 0.0
        %v904 = vand.u32 %v313, 4294901760
        %905 = vmatpush1.msra.mxu0 %v904
        %906 = vmatprep.subr.mxu0 0.0
        %v907 = vand.u32 %v314, 4294901760
        %908 = vmatpush1.msra.mxu0 %v907
        %909 = vmatprep.subr.mxu0 0.0
        %v910 = vand.u32 %v315, 4294901760
        %911 = vmatpush1.msra.mxu0 %v910
        %912 = vmatprep.subr.mxu0 0.0
        %v913 = vand.u32 %v316, 4294901760
        %914 = vmatpush1.msra.mxu0 %v913
        %915 = vmatprep.subr.mxu0 0.0
        %v916 = vand.u32 %v317, 4294901760
        %917 = vmatpush1.msra.mxu0 %v916
        %918 = vmatprep.subr.mxu0 0.0
        %v919 = vand.u32 %v318, 4294901760
        %920 = vmatpush1.msra.mxu0 %v919
        %921 = vmatprep.subr.mxu0 0.0
        %922 = vmatpush1.msra.mxu0 0.0
        %923 = vmatprep.subr.mxu0 0.0
        %924 = vmatpush1.msra.mxu0 0.0
        %925 = vmatprep.subr.mxu0 0.0
        %926 = vmatpush1.msra.mxu0 0.0
        %927 = vmatprep.subr.mxu0 0.0
        %928 = vmatpush1.msra.mxu0 0.0
        %929 = vmatprep.subr.mxu0 0.0
        %930 = vmatpush1.msra.mxu0 0.0
        %931 = vmatprep.subr.mxu0 0.0
        %932 = vmatpush1.msra.mxu0 0.0
        %933 = vmatprep.subr.mxu0 0.0
        %934 = vmatpush1.msra.mxu0 0.0
        %935 = vmatprep.subr.mxu0 0.0
        %936 = vmatpush1.msra.mxu0 0.0
        %937 = vmatprep.subr.mxu0 0.0
        %938 = vmatpush1.msra.mxu0 0.0
        %939 = vmatprep.subr.mxu0 0.0
        %940 = vmatpush1.msra.mxu0 0.0
        %941 = vmatprep.subr.mxu0 0.0
        %942 = vmatpush1.msra.mxu0 0.0
        %943 = vmatprep.subr.mxu0 0.0
        %944 = vmatpush1.msra.mxu0 0.0
        %945 = vmatprep.subr.mxu0 0.0
        %946 = vmatpush1.msra.mxu0 0.0
        %947 = vmatprep.subr.mxu0 0.0
        %948 = vmatpush1.msra.mxu0 0.0
        %949 = vmatprep.subr.mxu0 0.0
        %950 = vmatpush1.msra.mxu0 0.0
        %951 = vmatprep.subr.mxu0 0.0
        %952 = vmatpush1.msra.mxu0 0.0
        %953 = vmatprep.mubr.f32.mxu0 0.0
        %v954 = vand.u32 %v302, 4294901760
        %955 = vmatmul.mubr.f32.gmra.mrb[0].mxu0 %v954
        %v956 = vpop.f32.mrb[0].mxu0
        %v957 = vadd.f32 %v870, %v956
        %v958 = vpop.f32.mrb[0].mxu0
        %959 = vdwg.mxu0
        %v960 = vmul.f32 %v957, 0.0625
        %v961 = vld [vmem:[%s1] sm:$0x3]
        %v962 = vld [vmem:[%s2] sm:$0x3]
        %964 = vset.pattern.permute.xlu0 0
        %965 = vperm.xlu0 %964, %v962
        %v966 = vpop.permute.xlu0 %965
        %vm968 = vcmask 64512
        %v970 = vsel %vm968, %v961, 0
        %972 = vmatprep.subr.mxu0 0.0
        %v973 = vand.u32 %v960, 4294901760
        %974 = vmatpush1.msra.mxu0 %v973
        %975 = vmatprep.subr.mxu0 0.0
        %976 = vmatpush1.msra.mxu0 0.0
        %977 = vmatprep.subr.mxu0 0.0
        %978 = vmatpush1.msra.mxu0 0.0
        %979 = vmatprep.subr.mxu0 0.0
        %980 = vmatpush1.msra.mxu0 0.0
        %981 = vmatprep.subr.mxu0 0.0
        %982 = vmatpush1.msra.mxu0 0.0
        %983 = vmatprep.subr.mxu0 0.0
        %984 = vmatpush1.msra.mxu0 0.0
        %985 = vmatprep.subr.mxu0 0.0
        %986 = vmatpush1.msra.mxu0 0.0
        %987 = vmatprep.subr.mxu0 0.0
        %988 = vmatpush1.msra.mxu0 0.0
        %989 = vmatprep.subr.mxu0 0.0
        %990 = vmatpush1.msra.mxu0 0.0
        %991 = vmatprep.subr.mxu0 0.0
        %992 = vmatpush1.msra.mxu0 0.0
        %993 = vmatprep.subr.mxu0 0.0
        %994 = vmatpush1.msra.mxu0 0.0
        %995 = vmatprep.subr.mxu0 0.0
        %996 = vmatpush1.msra.mxu0 0.0
        %997 = vmatprep.subr.mxu0 0.0
        %998 = vmatpush1.msra.mxu0 0.0
        %999 = vmatprep.subr.mxu0 0.0
        %1000 = vmatpush1.msra.mxu0 0.0
        %1001 = vmatprep.subr.mxu0 0.0
        %1002 = vmatpush1.msra.mxu0 0.0
        %1003 = vmatprep.subr.mxu0 0.0
        %1004 = vmatpush1.msra.mxu0 0.0
        %1005 = vmatprep.subr.mxu0 0.0
        %1006 = vmatpush1.msra.mxu0 0.0
        %1007 = vmatprep.subr.mxu0 0.0
        %1008 = vmatpush1.msra.mxu0 0.0
        %1009 = vmatprep.subr.mxu0 0.0
        %1010 = vmatpush1.msra.mxu0 0.0
        %1011 = vmatprep.subr.mxu0 0.0
        %1012 = vmatpush1.msra.mxu0 0.0
        %1013 = vmatprep.subr.mxu0 0.0
        %1014 = vmatpush1.msra.mxu0 0.0
        %1015 = vmatprep.subr.mxu0 0.0
        %1016 = vmatpush1.msra.mxu0 0.0
        %1017 = vmatprep.subr.mxu0 0.0
        %1018 = vmatpush1.msra.mxu0 0.0
        %1019 = vmatprep.subr.mxu0 0.0
        %1020 = vmatpush1.msra.mxu0 0.0
        %1021 = vmatprep.subr.mxu0 0.0
        %1022 = vmatpush1.msra.mxu0 0.0
        %1023 = vmatprep.subr.mxu0 0.0
        %1024 = vmatpush1.msra.mxu0 0.0
        %1025 = vmatprep.subr.mxu0 0.0
        %1026 = vmatpush1.msra.mxu0 0.0
        %1027 = vmatprep.subr.mxu0 0.0
        %1028 = vmatpush1.msra.mxu0 0.0
        %1029 = vmatprep.subr.mxu0 0.0
        %1030 = vmatpush1.msra.mxu0 0.0
        %1031 = vmatprep.subr.mxu0 0.0
        %1032 = vmatpush1.msra.mxu0 0.0
        %1033 = vmatprep.subr.mxu0 0.0
        %1034 = vmatpush1.msra.mxu0 0.0
        %1035 = vmatprep.subr.mxu0 0.0
        %1036 = vmatpush1.msra.mxu0 0.0
        %1037 = vmatprep.mubr.f32.mxu0 0.0
        %v1038 = vand.u32 %v970, 4294901760
        %v1039 = vsub.f32 %v970, %v1038
        %v1040 = vand.u32 %v1039, 4294901760
        %v1041 = vsub.f32 %v1039, %v1040
        %v1042 = vand.u32 %v1041, 4294901760
        %1043 = vmatmul.mubr.f32.gmra.mrb[0].mxu0 %v1042
        %v1044 = vpop.f32.mrb[0].mxu0
        %v1045 = vadd.f32 %v966, %v1044
        %v1046 = vpop.f32.mrb[0].mxu0
        %1047 = vdwg.mxu0
        %1048 = vmatprep.subr.mxu0 0.0
        %v1049 = vand.u32 %v960, 4294901760
        %v1050 = vsub.f32 %v960, %v1049
        %v1051 = vand.u32 %v1050, 4294901760
        %v1052 = vsub.f32 %v1050, %v1051
        %v1053 = vand.u32 %v1052, 4294901760
        %1054 = vmatpush1.msra.mxu0 %v1053
        %1055 = vmatprep.subr.mxu0 0.0
        %1056 = vmatpush1.msra.mxu0 0.0
        %1057 = vmatprep.subr.mxu0 0.0
        %1058 = vmatpush1.msra.mxu0 0.0
        %1059 = vmatprep.subr.mxu0 0.0
        %1060 = vmatpush1.msra.mxu0 0.0
        %1061 = vmatprep.subr.mxu0 0.0
        %1062 = vmatpush1.msra.mxu0 0.0
        %1063 = vmatprep.subr.mxu0 0.0
        %1064 = vmatpush1.msra.mxu0 0.0
        %1065 = vmatprep.subr.mxu0 0.0
        %1066 = vmatpush1.msra.mxu0 0.0
        %1067 = vmatprep.subr.mxu0 0.0
        %1068 = vmatpush1.msra.mxu0 0.0
        %1069 = vmatprep.subr.mxu0 0.0
        %1070 = vmatpush1.msra.mxu0 0.0
        %1071 = vmatprep.subr.mxu0 0.0
        %1072 = vmatpush1.msra.mxu0 0.0
        %1073 = vmatprep.subr.mxu0 0.0
        %1074 = vmatpush1.msra.mxu0 0.0
        %1075 = vmatprep.subr.mxu0 0.0
        %1076 = vmatpush1.msra.mxu0 0.0
        %1077 = vmatprep.subr.mxu0 0.0
        %1078 = vmatpush1.msra.mxu0 0.0
        %1079 = vmatprep.subr.mxu0 0.0
        %1080 = vmatpush1.msra.mxu0 0.0
        %1081 = vmatprep.subr.mxu0 0.0
        %1082 = vmatpush1.msra.mxu0 0.0
        %1083 = vmatprep.subr.mxu0 0.0
        %1084 = vmatpush1.msra.mxu0 0.0
        %1085 = vmatprep.subr.mxu0 0.0
        %1086 = vmatpush1.msra.mxu0 0.0
        %1087 = vmatprep.subr.mxu0 0.0
        %1088 = vmatpush1.msra.mxu0 0.0
        %1089 = vmatprep.subr.mxu0 0.0
        %1090 = vmatpush1.msra.mxu0 0.0
        %1091 = vmatprep.subr.mxu0 0.0
        %1092 = vmatpush1.msra.mxu0 0.0
        %1093 = vmatprep.subr.mxu0 0.0
        %1094 = vmatpush1.msra.mxu0 0.0
        %1095 = vmatprep.subr.mxu0 0.0
        %1096 = vmatpush1.msra.mxu0 0.0
        %1097 = vmatprep.subr.mxu0 0.0
        %1098 = vmatpush1.msra.mxu0 0.0
        %1099 = vmatprep.subr.mxu0 0.0
        %1100 = vmatpush1.msra.mxu0 0.0
        %1101 = vmatprep.subr.mxu0 0.0
        %1102 = vmatpush1.msra.mxu0 0.0
        %1103 = vmatprep.subr.mxu0 0.0
        %1104 = vmatpush1.msra.mxu0 0.0
        %1105 = vmatprep.subr.mxu0 0.0
        %1106 = vmatpush1.msra.mxu0 0.0
        %1107 = vmatprep.subr.mxu0 0.0
        %1108 = vmatpush1.msra.mxu0 0.0
        %1109 = vmatprep.subr.mxu0 0.0
        %1110 = vmatpush1.msra.mxu0 0.0
        %1111 = vmatprep.subr.mxu0 0.0
        %1112 = vmatpush1.msra.mxu0 0.0
        %1113 = vmatprep.subr.mxu0 0.0
        %1114 = vmatpush1.msra.mxu0 0.0
        %1115 = vmatprep.subr.mxu0 0.0
        %1116 = vmatpush1.msra.mxu0 0.0
        %1117 = vmatprep.mubr.f32.mxu0 0.0
        %v1118 = vand.u32 %v970, 4294901760
        %1119 = vmatmul.mubr.f32.gmra.mrb[0].mxu0 %v1118
        %v1120 = vpop.f32.mrb[0].mxu0
        %v1121 = vadd.f32 %v1045, %v1120
        %v1122 = vpop.f32.mrb[0].mxu0
        %1123 = vdwg.mxu0
        %1124 = vmatprep.subr.mxu0 0.0
        %v1125 = vand.u32 %v960, 4294901760
        %v1126 = vsub.f32 %v960, %v1125
        %1127 = vmatpush1.msra.mxu0 %v1126
        %1128 = vmatprep.subr.mxu0 0.0
        %1129 = vmatpush1.msra.mxu0 0.0
        %1130 = vmatprep.subr.mxu0 0.0
        %1131 = vmatpush1.msra.mxu0 0.0
        %1132 = vmatprep.subr.mxu0 0.0
        %1133 = vmatpush1.msra.mxu0 0.0
        %1134 = vmatprep.subr.mxu0 0.0
        %1135 = vmatpush1.msra.mxu0 0.0
        %1136 = vmatprep.subr.mxu0 0.0
        %1137 = vmatpush1.msra.mxu0 0.0
        %1138 = vmatprep.subr.mxu0 0.0
        %1139 = vmatpush1.msra.mxu0 0.0
        %1140 = vmatprep.subr.mxu0 0.0
        %1141 = vmatpush1.msra.mxu0 0.0
        %1142 = vmatprep.subr.mxu0 0.0
        %1143 = vmatpush1.msra.mxu0 0.0
        %1144 = vmatprep.subr.mxu0 0.0
        %1145 = vmatpush1.msra.mxu0 0.0
        %1146 = vmatprep.subr.mxu0 0.0
        %1147 = vmatpush1.msra.mxu0 0.0
        %1148 = vmatprep.subr.mxu0 0.0
        %1149 = vmatpush1.msra.mxu0 0.0
        %1150 = vmatprep.subr.mxu0 0.0
        %1151 = vmatpush1.msra.mxu0 0.0
        %1152 = vmatprep.subr.mxu0 0.0
        %1153 = vmatpush1.msra.mxu0 0.0
        %1154 = vmatprep.subr.mxu0 0.0
        %1155 = vmatpush1.msra.mxu0 0.0
        %1156 = vmatprep.subr.mxu0 0.0
        %1157 = vmatpush1.msra.mxu0 0.0
        %1158 = vmatprep.subr.mxu0 0.0
        %1159 = vmatpush1.msra.mxu0 0.0
        %1160 = vmatprep.subr.mxu0 0.0
        %1161 = vmatpush1.msra.mxu0 0.0
        %1162 = vmatprep.subr.mxu0 0.0
        %1163 = vmatpush1.msra.mxu0 0.0
        %1164 = vmatprep.subr.mxu0 0.0
        %1165 = vmatpush1.msra.mxu0 0.0
        %1166 = vmatprep.subr.mxu0 0.0
        %1167 = vmatpush1.msra.mxu0 0.0
        %1168 = vmatprep.subr.mxu0 0.0
        %1169 = vmatpush1.msra.mxu0 0.0
        %1170 = vmatprep.subr.mxu0 0.0
        %1171 = vmatpush1.msra.mxu0 0.0
        %1172 = vmatprep.subr.mxu0 0.0
        %1173 = vmatpush1.msra.mxu0 0.0
        %1174 = vmatprep.subr.mxu0 0.0
        %1175 = vmatpush1.msra.mxu0 0.0
        %1176 = vmatprep.subr.mxu0 0.0
        %1177 = vmatpush1.msra.mxu0 0.0
        %1178 = vmatprep.subr.mxu0 0.0
        %1179 = vmatpush1.msra.mxu0 0.0
        %1180 = vmatprep.subr.mxu0 0.0
        %1181 = vmatpush1.msra.mxu0 0.0
        %1182 = vmatprep.subr.mxu0 0.0
        %1183 = vmatpush1.msra.mxu0 0.0
        %1184 = vmatprep.subr.mxu0 0.0
        %1185 = vmatpush1.msra.mxu0 0.0
        %1186 = vmatprep.subr.mxu0 0.0
        %1187 = vmatpush1.msra.mxu0 0.0
        %1188 = vmatprep.subr.mxu0 0.0
        %1189 = vmatpush1.msra.mxu0 0.0
        %1190 = vmatprep.mubr.f32.mxu0 0.0
        %v1191 = vand.u32 %v970, 4294901760
        %v1192 = vsub.f32 %v970, %v1191
        %1193 = vmatmul.mubr.f32.gmra.mrb[0].mxu0 %v1192
        %v1194 = vpop.f32.mrb[0].mxu0
        %v1195 = vadd.f32 %v1121, %v1194
        %v1196 = vpop.f32.mrb[0].mxu0
        %1197 = vdwg.mxu0
        %1198 = vmatprep.subr.mxu0 0.0
        %v1199 = vand.u32 %v960, 4294901760
        %1200 = vmatpush1.msra.mxu0 %v1199
        %1201 = vmatprep.subr.mxu0 0.0
        %1202 = vmatpush1.msra.mxu0 0.0
        %1203 = vmatprep.subr.mxu0 0.0
        %1204 = vmatpush1.msra.mxu0 0.0
        %1205 = vmatprep.subr.mxu0 0.0
        %1206 = vmatpush1.msra.mxu0 0.0
        %1207 = vmatprep.subr.mxu0 0.0
        %1208 = vmatpush1.msra.mxu0 0.0
        %1209 = vmatprep.subr.mxu0 0.0
        %1210 = vmatpush1.msra.mxu0 0.0
        %1211 = vmatprep.subr.mxu0 0.0
        %1212 = vmatpush1.msra.mxu0 0.0
        %1213 = vmatprep.subr.mxu0 0.0
        %1214 = vmatpush1.msra.mxu0 0.0
        %1215 = vmatprep.subr.mxu0 0.0
        %1216 = vmatpush1.msra.mxu0 0.0
        %1217 = vmatprep.subr.mxu0 0.0
        %1218 = vmatpush1.msra.mxu0 0.0
        %1219 = vmatprep.subr.mxu0 0.0
        %1220 = vmatpush1.msra.mxu0 0.0
        %1221 = vmatprep.subr.mxu0 0.0
        %1222 = vmatpush1.msra.mxu0 0.0
        %1223 = vmatprep.subr.mxu0 0.0
        %1224 = vmatpush1.msra.mxu0 0.0
        %1225 = vmatprep.subr.mxu0 0.0
        %1226 = vmatpush1.msra.mxu0 0.0
        %1227 = vmatprep.subr.mxu0 0.0
        %1228 = vmatpush1.msra.mxu0 0.0
        %1229 = vmatprep.subr.mxu0 0.0
        %1230 = vmatpush1.msra.mxu0 0.0
        %1231 = vmatprep.subr.mxu0 0.0
        %1232 = vmatpush1.msra.mxu0 0.0
        %1233 = vmatprep.subr.mxu0 0.0
        %1234 = vmatpush1.msra.mxu0 0.0
        %1235 = vmatprep.subr.mxu0 0.0
        %1236 = vmatpush1.msra.mxu0 0.0
        %1237 = vmatprep.subr.mxu0 0.0
        %1238 = vmatpush1.msra.mxu0 0.0
        %1239 = vmatprep.subr.mxu0 0.0
        %1240 = vmatpush1.msra.mxu0 0.0
        %1241 = vmatprep.subr.mxu0 0.0
        %1242 = vmatpush1.msra.mxu0 0.0
        %1243 = vmatprep.subr.mxu0 0.0
        %1244 = vmatpush1.msra.mxu0 0.0
        %1245 = vmatprep.subr.mxu0 0.0
        %1246 = vmatpush1.msra.mxu0 0.0
        %1247 = vmatprep.subr.mxu0 0.0
        %1248 = vmatpush1.msra.mxu0 0.0
        %1249 = vmatprep.subr.mxu0 0.0
        %1250 = vmatpush1.msra.mxu0 0.0
        %1251 = vmatprep.subr.mxu0 0.0
        %1252 = vmatpush1.msra.mxu0 0.0
        %1253 = vmatprep.subr.mxu0 0.0
        %1254 = vmatpush1.msra.mxu0 0.0
        %1255 = vmatprep.subr.mxu0 0.0
        %1256 = vmatpush1.msra.mxu0 0.0
        %1257 = vmatprep.subr.mxu0 0.0
        %1258 = vmatpush1.msra.mxu0 0.0
        %1259 = vmatprep.subr.mxu0 0.0
        %1260 = vmatpush1.msra.mxu0 0.0
        %1261 = vmatprep.subr.mxu0 0.0
        %1262 = vmatpush1.msra.mxu0 0.0
        %1263 = vmatprep.mubr.f32.mxu0 0.0
        %v1264 = vand.u32 %v970, 4294901760
        %v1265 = vsub.f32 %v970, %v1264
        %v1266 = vand.u32 %v1265, 4294901760
        %1267 = vmatmul.mubr.f32.gmra.mrb[0].mxu0 %v1266
        %v1268 = vpop.f32.mrb[0].mxu0
        %v1269 = vadd.f32 %v1195, %v1268
        %v1270 = vpop.f32.mrb[0].mxu0
        %1271 = vdwg.mxu0
        %1272 = vmatprep.subr.mxu0 0.0
        %v1273 = vand.u32 %v960, 4294901760
        %v1274 = vsub.f32 %v960, %v1273
        %v1275 = vand.u32 %v1274, 4294901760
        %1276 = vmatpush1.msra.mxu0 %v1275
        %1277 = vmatprep.subr.mxu0 0.0
        %1278 = vmatpush1.msra.mxu0 0.0
        %1279 = vmatprep.subr.mxu0 0.0
        %1280 = vmatpush1.msra.mxu0 0.0
        %1281 = vmatprep.subr.mxu0 0.0
        %1282 = vmatpush1.msra.mxu0 0.0
        %1283 = vmatprep.subr.mxu0 0.0
        %1284 = vmatpush1.msra.mxu0 0.0
        %1285 = vmatprep.subr.mxu0 0.0
        %1286 = vmatpush1.msra.mxu0 0.0
        %1287 = vmatprep.subr.mxu0 0.0
        %1288 = vmatpush1.msra.mxu0 0.0
        %1289 = vmatprep.subr.mxu0 0.0
        %1290 = vmatpush1.msra.mxu0 0.0
        %1291 = vmatprep.subr.mxu0 0.0
        %1292 = vmatpush1.msra.mxu0 0.0
        %1293 = vmatprep.subr.mxu0 0.0
        %1294 = vmatpush1.msra.mxu0 0.0
        %1295 = vmatprep.subr.mxu0 0.0
        %1296 = vmatpush1.msra.mxu0 0.0
        %1297 = vmatprep.subr.mxu0 0.0
        %1298 = vmatpush1.msra.mxu0 0.0
        %1299 = vmatprep.subr.mxu0 0.0
        %1300 = vmatpush1.msra.mxu0 0.0
        %1301 = vmatprep.subr.mxu0 0.0
        %1302 = vmatpush1.msra.mxu0 0.0
        %1303 = vmatprep.subr.mxu0 0.0
        %1304 = vmatpush1.msra.mxu0 0.0
        %1305 = vmatprep.subr.mxu0 0.0
        %1306 = vmatpush1.msra.mxu0 0.0
        %1307 = vmatprep.subr.mxu0 0.0
        %1308 = vmatpush1.msra.mxu0 0.0
        %1309 = vmatprep.subr.mxu0 0.0
        %1310 = vmatpush1.msra.mxu0 0.0
        %1311 = vmatprep.subr.mxu0 0.0
        %1312 = vmatpush1.msra.mxu0 0.0
        %1313 = vmatprep.subr.mxu0 0.0
        %1314 = vmatpush1.msra.mxu0 0.0
        %1315 = vmatprep.subr.mxu0 0.0
        %1316 = vmatpush1.msra.mxu0 0.0
        %1317 = vmatprep.subr.mxu0 0.0
        %1318 = vmatpush1.msra.mxu0 0.0
        %1319 = vmatprep.subr.mxu0 0.0
        %1320 = vmatpush1.msra.mxu0 0.0
        %1321 = vmatprep.subr.mxu0 0.0
        %1322 = vmatpush1.msra.mxu0 0.0
        %1323 = vmatprep.subr.mxu0 0.0
        %1324 = vmatpush1.msra.mxu0 0.0
        %1325 = vmatprep.subr.mxu0 0.0
        %1326 = vmatpush1.msra.mxu0 0.0
        %1327 = vmatprep.subr.mxu0 0.0
        %1328 = vmatpush1.msra.mxu0 0.0
        %1329 = vmatprep.subr.mxu0 0.0
        %1330 = vmatpush1.msra.mxu0 0.0
        %1331 = vmatprep.subr.mxu0 0.0
        %1332 = vmatpush1.msra.mxu0 0.0
        %1333 = vmatprep.subr.mxu0 0.0
        %1334 = vmatpush1.msra.mxu0 0.0
        %1335 = vmatprep.subr.mxu0 0.0
        %1336 = vmatpush1.msra.mxu0 0.0
        %1337 = vmatprep.subr.mxu0 0.0
        %1338 = vmatpush1.msra.mxu0 0.0
        %1339 = vmatprep.mubr.f32.mxu0 0.0
        %v1340 = vand.u32 %v970, 4294901760
        %1341 = vmatmul.mubr.f32.gmra.mrb[0].mxu0 %v1340
        %v1342 = vpop.f32.mrb[0].mxu0
        %v1343 = vadd.f32 %v1269, %v1342
        %v1344 = vpop.f32.mrb[0].mxu0
        %1345 = vdwg.mxu0
        %1346 = vmatprep.subr.mxu0 0.0
        %v1347 = vand.u32 %v960, 4294901760
        %1348 = vmatpush1.msra.mxu0 %v1347
        %1349 = vmatprep.subr.mxu0 0.0
        %1350 = vmatpush1.msra.mxu0 0.0
        %1351 = vmatprep.subr.mxu0 0.0
        %1352 = vmatpush1.msra.mxu0 0.0
        %1353 = vmatprep.subr.mxu0 0.0
        %1354 = vmatpush1.msra.mxu0 0.0
        %1355 = vmatprep.subr.mxu0 0.0
        %1356 = vmatpush1.msra.mxu0 0.0
        %1357 = vmatprep.subr.mxu0 0.0
        %1358 = vmatpush1.msra.mxu0 0.0
        %1359 = vmatprep.subr.mxu0 0.0
        %1360 = vmatpush1.msra.mxu0 0.0
        %1361 = vmatprep.subr.mxu0 0.0
        %1362 = vmatpush1.msra.mxu0 0.0
        %1363 = vmatprep.subr.mxu0 0.0
        %1364 = vmatpush1.msra.mxu0 0.0
        %1365 = vmatprep.subr.mxu0 0.0
        %1366 = vmatpush1.msra.mxu0 0.0
        %1367 = vmatprep.subr.mxu0 0.0
        %1368 = vmatpush1.msra.mxu0 0.0
        %1369 = vmatprep.subr.mxu0 0.0
        %1370 = vmatpush1.msra.mxu0 0.0
        %1371 = vmatprep.subr.mxu0 0.0
        %1372 = vmatpush1.msra.mxu0 0.0
        %1373 = vmatprep.subr.mxu0 0.0
        %1374 = vmatpush1.msra.mxu0 0.0
        %1375 = vmatprep.subr.mxu0 0.0
        %1376 = vmatpush1.msra.mxu0 0.0
        %1377 = vmatprep.subr.mxu0 0.0
        %1378 = vmatpush1.msra.mxu0 0.0
        %1379 = vmatprep.subr.mxu0 0.0
        %1380 = vmatpush1.msra.mxu0 0.0
        %1381 = vmatprep.subr.mxu0 0.0
        %1382 = vmatpush1.msra.mxu0 0.0
        %1383 = vmatprep.subr.mxu0 0.0
        %1384 = vmatpush1.msra.mxu0 0.0
        %1385 = vmatprep.subr.mxu0 0.0
        %1386 = vmatpush1.msra.mxu0 0.0
        %1387 = vmatprep.subr.mxu0 0.0
        %1388 = vmatpush1.msra.mxu0 0.0
        %1389 = vmatprep.subr.mxu0 0.0
        %1390 = vmatpush1.msra.mxu0 0.0
        %1391 = vmatprep.subr.mxu0 0.0
        %1392 = vmatpush1.msra.mxu0 0.0
        %1393 = vmatprep.subr.mxu0 0.0
        %1394 = vmatpush1.msra.mxu0 0.0
        %1395 = vmatprep.subr.mxu0 0.0
        %1396 = vmatpush1.msra.mxu0 0.0
        %1397 = vmatprep.subr.mxu0 0.0
        %1398 = vmatpush1.msra.mxu0 0.0
        %1399 = vmatprep.subr.mxu0 0.0
        %1400 = vmatpush1.msra.mxu0 0.0
        %1401 = vmatprep.subr.mxu0 0.0
        %1402 = vmatpush1.msra.mxu0 0.0
        %1403 = vmatprep.subr.mxu0 0.0
        %1404 = vmatpush1.msra.mxu0 0.0
        %1405 = vmatprep.subr.mxu0 0.0
        %1406 = vmatpush1.msra.mxu0 0.0
        %1407 = vmatprep.subr.mxu0 0.0
        %1408 = vmatpush1.msra.mxu0 0.0
        %1409 = vmatprep.subr.mxu0 0.0
        %1410 = vmatpush1.msra.mxu0 0.0
        %1411 = vmatprep.mubr.f32.mxu0 0.0
        %v1412 = vand.u32 %v970, 4294901760
        %1413 = vmatmul.mubr.f32.gmra.mrb[0].mxu0 %v1412
        %v1414 = vpop.f32.mrb[0].mxu0
        %v1415 = vadd.f32 %v1343, %v1414
        %v1416 = vpop.f32.mrb[0].mxu0
        %1417 = vdwg.mxu0
        %v1418 = vmax.f32 %v1415, 0.0
        %v1419 = vld [vmem:[%s3] sm:$0xff]
        %v1420 = vld [vmem:[%s4] sm:$0xff]
        %1422 = vset.pattern.permute.xlu0 0
        %1423 = vperm.xlu0 %1422, %v1420
        %v1424 = vpop.permute.xlu0 %1423
        %vm1426 = vcmask 15360
        %v1428 = vsel %vm1426, %v1419, 0
        %vm1430 = vcmask 1041408
        %v1432 = vsel %vm1430, %v1418, 0
        %1434 = vmatprep.subr.mxu0 0.0
        %v1435 = vand.u32 %v1432, 4294901760
        %1436 = vmatpush1.msra.mxu0 %v1435
        %1437 = vmatprep.subr.mxu0 0.0
        %1438 = vmatpush1.msra.mxu0 0.0
        %1439 = vmatprep.subr.mxu0 0.0
        %1440 = vmatpush1.msra.mxu0 0.0
        %1441 = vmatprep.subr.mxu0 0.0
        %1442 = vmatpush1.msra.mxu0 0.0
        %1443 = vmatprep.subr.mxu0 0.0
        %1444 = vmatpush1.msra.mxu0 0.0
        %1445 = vmatprep.subr.mxu0 0.0
        %1446 = vmatpush1.msra.mxu0 0.0
        %1447 = vmatprep.subr.mxu0 0.0
        %1448 = vmatpush1.msra.mxu0 0.0
        %1449 = vmatprep.subr.mxu0 0.0
        %1450 = vmatpush1.msra.mxu0 0.0
        %1451 = vmatprep.subr.mxu0 0.0
        %1452 = vmatpush1.msra.mxu0 0.0
        %1453 = vmatprep.subr.mxu0 0.0
        %1454 = vmatpush1.msra.mxu0 0.0
        %1455 = vmatprep.subr.mxu0 0.0
        %1456 = vmatpush1.msra.mxu0 0.0
        %1457 = vmatprep.subr.mxu0 0.0
        %1458 = vmatpush1.msra.mxu0 0.0
        %1459 = vmatprep.subr.mxu0 0.0
        %1460 = vmatpush1.msra.mxu0 0.0
        %1461 = vmatprep.subr.mxu0 0.0
        %1462 = vmatpush1.msra.mxu0 0.0
        %1463 = vmatprep.subr.mxu0 0.0
        %1464 = vmatpush1.msra.mxu0 0.0
        %1465 = vmatprep.subr.mxu0 0.0
        %1466 = vmatpush1.msra.mxu0 0.0
        %1467 = vmatprep.subr.mxu0 0.0
        %1468 = vmatpush1.msra.mxu0 0.0
        %1469 = vmatprep.subr.mxu0 0.0
        %1470 = vmatpush1.msra.mxu0 0.0
        %1471 = vmatprep.subr.mxu0 0.0
        %1472 = vmatpush1.msra.mxu0 0.0
        %1473 = vmatprep.subr.mxu0 0.0
        %1474 = vmatpush1.msra.mxu0 0.0
        %1475 = vmatprep.subr.mxu0 0.0
        %1476 = vmatpush1.msra.mxu0 0.0
        %1477 = vmatprep.subr.mxu0 0.0
        %1478 = vmatpush1.msra.mxu0 0.0
        %1479 = vmatprep.subr.mxu0 0.0
        %1480 = vmatpush1.msra.mxu0 0.0
        %1481 = vmatprep.subr.mxu0 0.0
        %1482 = vmatpush1.msra.mxu0 0.0
        %1483 = vmatprep.subr.mxu0 0.0
        %1484 = vmatpush1.msra.mxu0 0.0
        %1485 = vmatprep.subr.mxu0 0.0
        %1486 = vmatpush1.msra.mxu0 0.0
        %1487 = vmatprep.subr.mxu0 0.0
        %1488 = vmatpush1.msra.mxu0 0.0
        %1489 = vmatprep.subr.mxu0 0.0
        %1490 = vmatpush1.msra.mxu0 0.0
        %1491 = vmatprep.subr.mxu0 0.0
        %1492 = vmatpush1.msra.mxu0 0.0
        %1493 = vmatprep.subr.mxu0 0.0
        %1494 = vmatpush1.msra.mxu0 0.0
        %1495 = vmatprep.subr.mxu0 0.0
        %1496 = vmatpush1.msra.mxu0 0.0
        %1497 = vmatprep.subr.mxu0 0.0
        %1498 = vmatpush1.msra.mxu0 0.0
        %1499 = vmatprep.mubr.f32.mxu0 0.0
        %v1500 = vand.u32 %v1428, 4294901760
        %v1501 = vsub.f32 %v1428, %v1500
        %v1502 = vand.u32 %v1501, 4294901760
        %v1503 = vsub.f32 %v1501, %v1502
        %v1504 = vand.u32 %v1503, 4294901760
        %1505 = vmatmul.mubr.f32.gmra.mrb[0].mxu0 %v1504
        %v1506 = vpop.f32.mrb[0].mxu0
        %v1507 = vadd.f32 %v1424, %v1506
        %v1508 = vpop.f32.mrb[0].mxu0
        %1509 = vdwg.mxu0
        %1510 = vmatprep.subr.mxu0 0.0
        %v1511 = vand.u32 %v1432, 4294901760
        %v1512 = vsub.f32 %v1432, %v1511
        %v1513 = vand.u32 %v1512, 4294901760
        %v1514 = vsub.f32 %v1512, %v1513
        %v1515 = vand.u32 %v1514, 4294901760
        %1516 = vmatpush1.msra.mxu0 %v1515
        %1517 = vmatprep.subr.mxu0 0.0
        %1518 = vmatpush1.msra.mxu0 0.0
        %1519 = vmatprep.subr.mxu0 0.0
        %1520 = vmatpush1.msra.mxu0 0.0
        %1521 = vmatprep.subr.mxu0 0.0
        %1522 = vmatpush1.msra.mxu0 0.0
        %1523 = vmatprep.subr.mxu0 0.0
        %1524 = vmatpush1.msra.mxu0 0.0
        %1525 = vmatprep.subr.mxu0 0.0
        %1526 = vmatpush1.msra.mxu0 0.0
        %1527 = vmatprep.subr.mxu0 0.0
        %1528 = vmatpush1.msra.mxu0 0.0
        %1529 = vmatprep.subr.mxu0 0.0
        %1530 = vmatpush1.msra.mxu0 0.0
        %1531 = vmatprep.subr.mxu0 0.0
        %1532 = vmatpush1.msra.mxu0 0.0
        %1533 = vmatprep.subr.mxu0 0.0
        %1534 = vmatpush1.msra.mxu0 0.0
        %1535 = vmatprep.subr.mxu0 0.0
        %1536 = vmatpush1.msra.mxu0 0.0
        %1537 = vmatprep.subr.mxu0 0.0
        %1538 = vmatpush1.msra.mxu0 0.0
        %1539 = vmatprep.subr.mxu0 0.0
        %1540 = vmatpush1.msra.mxu0 0.0
        %1541 = vmatprep.subr.mxu0 0.0
        %1542 = vmatpush1.msra.mxu0 0.0
        %1543 = vmatprep.subr.mxu0 0.0
        %1544 = vmatpush1.msra.mxu0 0.0
        %1545 = vmatprep.subr.mxu0 0.0
        %1546 = vmatpush1.msra.mxu0 0.0
        %1547 = vmatprep.subr.mxu0 0.0
        %1548 = vmatpush1.msra.mxu0 0.0
        %1549 = vmatprep.subr.mxu0 0.0
        %1550 = vmatpush1.msra.mxu0 0.0
        %1551 = vmatprep.subr.mxu0 0.0
        %1552 = vmatpush1.msra.mxu0 0.0
        %1553 = vmatprep.subr.mxu0 0.0
        %1554 = vmatpush1.msra.mxu0 0.0
        %1555 = vmatprep.subr.mxu0 0.0
        %1556 = vmatpush1.msra.mxu0 0.0
        %1557 = vmatprep.subr.mxu0 0.0
        %1558 = vmatpush1.msra.mxu0 0.0
        %1559 = vmatprep.subr.mxu0 0.0
        %1560 = vmatpush1.msra.mxu0 0.0
        %1561 = vmatprep.subr.mxu0 0.0
        %1562 = vmatpush1.msra.mxu0 0.0
        %1563 = vmatprep.subr.mxu0 0.0
        %1564 = vmatpush1.msra.mxu0 0.0
        %1565 = vmatprep.subr.mxu0 0.0
        %1566 = vmatpush1.msra.mxu0 0.0
        %1567 = vmatprep.subr.mxu0 0.0
        %1568 = vmatpush1.msra.mxu0 0.0
        %1569 = vmatprep.subr.mxu0 0.0
        %1570 = vmatpush1.msra.mxu0 0.0
        %1571 = vmatprep.subr.mxu0 0.0
        %1572 = vmatpush1.msra.mxu0 0.0
        %1573 = vmatprep.subr.mxu0 0.0
        %1574 = vmatpush1.msra.mxu0 0.0
        %1575 = vmatprep.subr.mxu0 0.0
        %1576 = vmatpush1.msra.mxu0 0.0
        %1577 = vmatprep.subr.mxu0 0.0
        %1578 = vmatpush1.msra.mxu0 0.0
        %1579 = vmatprep.mubr.f32.mxu0 0.0
        %v1580 = vand.u32 %v1428, 4294901760
        %1581 = vmatmul.mubr.f32.gmra.mrb[0].mxu0 %v1580
        %v1582 = vpop.f32.mrb[0].mxu0
        %v1583 = vadd.f32 %v1507, %v1582
        %v1584 = vpop.f32.mrb[0].mxu0
        %1585 = vdwg.mxu0
        %1586 = vmatprep.subr.mxu0 0.0
        %v1587 = vand.u32 %v1432, 4294901760
        %v1588 = vsub.f32 %v1432, %v1587
        %1589 = vmatpush1.msra.mxu0 %v1588
        %1590 = vmatprep.subr.mxu0 0.0
        %1591 = vmatpush1.msra.mxu0 0.0
        %1592 = vmatprep.subr.mxu0 0.0
        %1593 = vmatpush1.msra.mxu0 0.0
        %1594 = vmatprep.subr.mxu0 0.0
        %1595 = vmatpush1.msra.mxu0 0.0
        %1596 = vmatprep.subr.mxu0 0.0
        %1597 = vmatpush1.msra.mxu0 0.0
        %1598 = vmatprep.subr.mxu0 0.0
        %1599 = vmatpush1.msra.mxu0 0.0
        %1600 = vmatprep.subr.mxu0 0.0
        %1601 = vmatpush1.msra.mxu0 0.0
        %1602 = vmatprep.subr.mxu0 0.0
        %1603 = vmatpush1.msra.mxu0 0.0
        %1604 = vmatprep.subr.mxu0 0.0
        %1605 = vmatpush1.msra.mxu0 0.0
        %1606 = vmatprep.subr.mxu0 0.0
        %1607 = vmatpush1.msra.mxu0 0.0
        %1608 = vmatprep.subr.mxu0 0.0
        %1609 = vmatpush1.msra.mxu0 0.0
        %1610 = vmatprep.subr.mxu0 0.0
        %1611 = vmatpush1.msra.mxu0 0.0
        %1612 = vmatprep.subr.mxu0 0.0
        %1613 = vmatpush1.msra.mxu0 0.0
        %1614 = vmatprep.subr.mxu0 0.0
        %1615 = vmatpush1.msra.mxu0 0.0
        %1616 = vmatprep.subr.mxu0 0.0
        %1617 = vmatpush1.msra.mxu0 0.0
        %1618 = vmatprep.subr.mxu0 0.0
        %1619 = vmatpush1.msra.mxu0 0.0
        %1620 = vmatprep.subr.mxu0 0.0
        %1621 = vmatpush1.msra.mxu0 0.0
        %1622 = vmatprep.subr.mxu0 0.0
        %1623 = vmatpush1.msra.mxu0 0.0
        %1624 = vmatprep.subr.mxu0 0.0
        %1625 = vmatpush1.msra.mxu0 0.0
        %1626 = vmatprep.subr.mxu0 0.0
        %1627 = vmatpush1.msra.mxu0 0.0
        %1628 = vmatprep.subr.mxu0 0.0
        %1629 = vmatpush1.msra.mxu0 0.0
        %1630 = vmatprep.subr.mxu0 0.0
        %1631 = vmatpush1.msra.mxu0 0.0
        %1632 = vmatprep.subr.mxu0 0.0
        %1633 = vmatpush1.msra.mxu0 0.0
        %1634 = vmatprep.subr.mxu0 0.0
        %1635 = vmatpush1.msra.mxu0 0.0
        %1636 = vmatprep.subr.mxu0 0.0
        %1637 = vmatpush1.msra.mxu0 0.0
        %1638 = vmatprep.subr.mxu0 0.0
        %1639 = vmatpush1.msra.mxu0 0.0
        %1640 = vmatprep.subr.mxu0 0.0
        %1641 = vmatpush1.msra.mxu0 0.0
        %1642 = vmatprep.subr.mxu0 0.0
        %1643 = vmatpush1.msra.mxu0 0.0
        %1644 = vmatprep.subr.mxu0 0.0
        %1645 = vmatpush1.msra.mxu0 0.0
        %1646 = vmatprep.subr.mxu0 0.0
        %1647 = vmatpush1.msra.mxu0 0.0
        %1648 = vmatprep.subr.mxu0 0.0
        %1649 = vmatpush1.msra.mxu0 0.0
        %1650 = vmatprep.subr.mxu0 0.0
        %1651 = vmatpush1.msra.mxu0 0.0
        %1652 = vmatprep.mubr.f32.mxu0 0.0
        %v1653 = vand.u32 %v1428, 4294901760
        %v1654 = vsub.f32 %v1428, %v1653
        %1655 = vmatmul.mubr.f32.gmra.mrb[0].mxu0 %v1654
        %v1656 = vpop.f32.mrb[0].mxu0
        %v1657 = vadd.f32 %v1583, %v1656
        %v1658 = vpop.f32.mrb[0].mxu0
        %1659 = vdwg.mxu0
        %1660 = vmatprep.subr.mxu0 0.0
        %v1661 = vand.u32 %v1432, 4294901760
        %1662 = vmatpush1.msra.mxu0 %v1661
        %1663 = vmatprep.subr.mxu0 0.0
        %1664 = vmatpush1.msra.mxu0 0.0
        %1665 = vmatprep.subr.mxu0 0.0
        %1666 = vmatpush1.msra.mxu0 0.0
        %1667 = vmatprep.subr.mxu0 0.0
        %1668 = vmatpush1.msra.mxu0 0.0
        %1669 = vmatprep.subr.mxu0 0.0
        %1670 = vmatpush1.msra.mxu0 0.0
        %1671 = vmatprep.subr.mxu0 0.0
        %1672 = vmatpush1.msra.mxu0 0.0
        %1673 = vmatprep.subr.mxu0 0.0
        %1674 = vmatpush1.msra.mxu0 0.0
        %1675 = vmatprep.subr.mxu0 0.0
        %1676 = vmatpush1.msra.mxu0 0.0
        %1677 = vmatprep.subr.mxu0 0.0
        %1678 = vmatpush1.msra.mxu0 0.0
        %1679 = vmatprep.subr.mxu0 0.0
        %1680 = vmatpush1.msra.mxu0 0.0
        %1681 = vmatprep.subr.mxu0 0.0
        %1682 = vmatpush1.msra.mxu0 0.0
        %1683 = vmatprep.subr.mxu0 0.0
        %1684 = vmatpush1.msra.mxu0 0.0
        %1685 = vmatprep.subr.mxu0 0.0
        %1686 = vmatpush1.msra.mxu0 0.0
        %1687 = vmatprep.subr.mxu0 0.0
        %1688 = vmatpush1.msra.mxu0 0.0
        %1689 = vmatprep.subr.mxu0 0.0
        %1690 = vmatpush1.msra.mxu0 0.0
        %1691 = vmatprep.subr.mxu0 0.0
        %1692 = vmatpush1.msra.mxu0 0.0
        %1693 = vmatprep.subr.mxu0 0.0
        %1694 = vmatpush1.msra.mxu0 0.0
        %1695 = vmatprep.subr.mxu0 0.0
        %1696 = vmatpush1.msra.mxu0 0.0
        %1697 = vmatprep.subr.mxu0 0.0
        %1698 = vmatpush1.msra.mxu0 0.0
        %1699 = vmatprep.subr.mxu0 0.0
        %1700 = vmatpush1.msra.mxu0 0.0
        %1701 = vmatprep.subr.mxu0 0.0
        %1702 = vmatpush1.msra.mxu0 0.0
        %1703 = vmatprep.subr.mxu0 0.0
        %1704 = vmatpush1.msra.mxu0 0.0
        %1705 = vmatprep.subr.mxu0 0.0
        %1706 = vmatpush1.msra.mxu0 0.0
        %1707 = vmatprep.subr.mxu0 0.0
        %1708 = vmatpush1.msra.mxu0 0.0
        %1709 = vmatprep.subr.mxu0 0.0
        %1710 = vmatpush1.msra.mxu0 0.0
        %1711 = vmatprep.subr.mxu0 0.0
        %1712 = vmatpush1.msra.mxu0 0.0
        %1713 = vmatprep.subr.mxu0 0.0
        %1714 = vmatpush1.msra.mxu0 0.0
        %1715 = vmatprep.subr.mxu0 0.0
        %1716 = vmatpush1.msra.mxu0 0.0
        %1717 = vmatprep.subr.mxu0 0.0
        %1718 = vmatpush1.msra.mxu0 0.0
        %1719 = vmatprep.subr.mxu0 0.0
        %1720 = vmatpush1.msra.mxu0 0.0
        %1721 = vmatprep.subr.mxu0 0.0
        %1722 = vmatpush1.msra.mxu0 0.0
        %1723 = vmatprep.subr.mxu0 0.0
        %1724 = vmatpush1.msra.mxu0 0.0
        %1725 = vmatprep.mubr.f32.mxu0 0.0
        %v1726 = vand.u32 %v1428, 4294901760
        %v1727 = vsub.f32 %v1428, %v1726
        %v1728 = vand.u32 %v1727, 4294901760
        %1729 = vmatmul.mubr.f32.gmra.mrb[0].mxu0 %v1728
        %v1730 = vpop.f32.mrb[0].mxu0
        %v1731 = vadd.f32 %v1657, %v1730
        %v1732 = vpop.f32.mrb[0].mxu0
        %1733 = vdwg.mxu0
        %1734 = vmatprep.subr.mxu0 0.0
        %v1735 = vand.u32 %v1432, 4294901760
        %v1736 = vsub.f32 %v1432, %v1735
        %v1737 = vand.u32 %v1736, 4294901760
        %1738 = vmatpush1.msra.mxu0 %v1737
        %1739 = vmatprep.subr.mxu0 0.0
        %1740 = vmatpush1.msra.mxu0 0.0
        %1741 = vmatprep.subr.mxu0 0.0
        %1742 = vmatpush1.msra.mxu0 0.0
        %1743 = vmatprep.subr.mxu0 0.0
        %1744 = vmatpush1.msra.mxu0 0.0
        %1745 = vmatprep.subr.mxu0 0.0
        %1746 = vmatpush1.msra.mxu0 0.0
        %1747 = vmatprep.subr.mxu0 0.0
        %1748 = vmatpush1.msra.mxu0 0.0
        %1749 = vmatprep.subr.mxu0 0.0
        %1750 = vmatpush1.msra.mxu0 0.0
        %1751 = vmatprep.subr.mxu0 0.0
        %1752 = vmatpush1.msra.mxu0 0.0
        %1753 = vmatprep.subr.mxu0 0.0
        %1754 = vmatpush1.msra.mxu0 0.0
        %1755 = vmatprep.subr.mxu0 0.0
        %1756 = vmatpush1.msra.mxu0 0.0
        %1757 = vmatprep.subr.mxu0 0.0
        %1758 = vmatpush1.msra.mxu0 0.0
        %1759 = vmatprep.subr.mxu0 0.0
        %1760 = vmatpush1.msra.mxu0 0.0
        %1761 = vmatprep.subr.mxu0 0.0
        %1762 = vmatpush1.msra.mxu0 0.0
        %1763 = vmatprep.subr.mxu0 0.0
        %1764 = vmatpush1.msra.mxu0 0.0
        %1765 = vmatprep.subr.mxu0 0.0
        %1766 = vmatpush1.msra.mxu0 0.0
        %1767 = vmatprep.subr.mxu0 0.0
        %1768 = vmatpush1.msra.mxu0 0.0
        %1769 = vmatprep.subr.mxu0 0.0
        %1770 = vmatpush1.msra.mxu0 0.0
        %1771 = vmatprep.subr.mxu0 0.0
        %1772 = vmatpush1.msra.mxu0 0.0
        %1773 = vmatprep.subr.mxu0 0.0
        %1774 = vmatpush1.msra.mxu0 0.0
        %1775 = vmatprep.subr.mxu0 0.0
        %1776 = vmatpush1.msra.mxu0 0.0
        %1777 = vmatprep.subr.mxu0 0.0
        %1778 = vmatpush1.msra.mxu0 0.0
        %1779 = vmatprep.subr.mxu0 0.0
        %1780 = vmatpush1.msra.mxu0 0.0
        %1781 = vmatprep.subr.mxu0 0.0
        %1782 = vmatpush1.msra.mxu0 0.0
        %1783 = vmatprep.subr.mxu0 0.0
        %1784 = vmatpush1.msra.mxu0 0.0
        %1785 = vmatprep.subr.mxu0 0.0
        %1786 = vmatpush1.msra.mxu0 0.0
        %1787 = vmatprep.subr.mxu0 0.0
        %1788 = vmatpush1.msra.mxu0 0.0
        %1789 = vmatprep.subr.mxu0 0.0
        %1790 = vmatpush1.msra.mxu0 0.0
        %1791 = vmatprep.subr.mxu0 0.0
        %1792 = vmatpush1.msra.mxu0 0.0
        %1793 = vmatprep.subr.mxu0 0.0
        %1794 = vmatpush1.msra.mxu0 0.0
        %1795 = vmatprep.subr.mxu0 0.0
        %1796 = vmatpush1.msra.mxu0 0.0
        %1797 = vmatprep.subr.mxu0 0.0
        %1798 = vmatpush1.msra.mxu0 0.0
        %1799 = vmatprep.subr.mxu0 0.0
        %1800 = vmatpush1.msra.mxu0 0.0
        %1801 = vmatprep.mubr.f32.mxu0 0.0
        %v1802 = vand.u32 %v1428, 4294901760
        %1803 = vmatmul.mubr.f32.gmra.mrb[0].mxu0 %v1802
        %v1804 = vpop.f32.mrb[0].mxu0
        %v1805 = vadd.f32 %v1731, %v1804
        %v1806 = vpop.f32.mrb[0].mxu0
        %1807 = vdwg.mxu0
        %1808 = vmatprep.subr.mxu0 0.0
        %v1809 = vand.u32 %v1432, 4294901760
        %1810 = vmatpush1.msra.mxu0 %v1809
        %1811 = vmatprep.subr.mxu0 0.0
        %1812 = vmatpush1.msra.mxu0 0.0
        %1813 = vmatprep.subr.mxu0 0.0
        %1814 = vmatpush1.msra.mxu0 0.0
        %1815 = vmatprep.subr.mxu0 0.0
        %1816 = vmatpush1.msra.mxu0 0.0
        %1817 = vmatprep.subr.mxu0 0.0
        %1818 = vmatpush1.msra.mxu0 0.0
        %1819 = vmatprep.subr.mxu0 0.0
        %1820 = vmatpush1.msra.mxu0 0.0
        %1821 = vmatprep.subr.mxu0 0.0
        %1822 = vmatpush1.msra.mxu0 0.0
        %1823 = vmatprep.subr.mxu0 0.0
        %1824 = vmatpush1.msra.mxu0 0.0
        %1825 = vmatprep.subr.mxu0 0.0
        %1826 = vmatpush1.msra.mxu0 0.0
        %1827 = vmatprep.subr.mxu0 0.0
        %1828 = vmatpush1.msra.mxu0 0.0
        %1829 = vmatprep.subr.mxu0 0.0
        %1830 = vmatpush1.msra.mxu0 0.0
        %1831 = vmatprep.subr.mxu0 0.0
        %1832 = vmatpush1.msra.mxu0 0.0
        %1833 = vmatprep.subr.mxu0 0.0
        %1834 = vmatpush1.msra.mxu0 0.0
        %1835 = vmatprep.subr.mxu0 0.0
        %1836 = vmatpush1.msra.mxu0 0.0
        %1837 = vmatprep.subr.mxu0 0.0
        %1838 = vmatpush1.msra.mxu0 0.0
        %1839 = vmatprep.subr.mxu0 0.0
        %1840 = vmatpush1.msra.mxu0 0.0
        %1841 = vmatprep.subr.mxu0 0.0
        %1842 = vmatpush1.msra.mxu0 0.0
        %1843 = vmatprep.subr.mxu0 0.0
        %1844 = vmatpush1.msra.mxu0 0.0
        %1845 = vmatprep.subr.mxu0 0.0
        %1846 = vmatpush1.msra.mxu0 0.0
        %1847 = vmatprep.subr.mxu0 0.0
        %1848 = vmatpush1.msra.mxu0 0.0
        %1849 = vmatprep.subr.mxu0 0.0
        %1850 = vmatpush1.msra.mxu0 0.0
        %1851 = vmatprep.subr.mxu0 0.0
        %1852 = vmatpush1.msra.mxu0 0.0
        %1853 = vmatprep.subr.mxu0 0.0
        %1854 = vmatpush1.msra.mxu0 0.0
        %1855 = vmatprep.subr.mxu0 0.0
        %1856 = vmatpush1.msra.mxu0 0.0
        %1857 = vmatprep.subr.mxu0 0.0
        %1858 = vmatpush1.msra.mxu0 0.0
        %1859 = vmatprep.subr.mxu0 0.0
        %1860 = vmatpush1.msra.mxu0 0.0
        %1861 = vmatprep.subr.mxu0 0.0
        %1862 = vmatpush1.msra.mxu0 0.0
        %1863 = vmatprep.subr.mxu0 0.0
        %1864 = vmatpush1.msra.mxu0 0.0
        %1865 = vmatprep.subr.mxu0 0.0
        %1866 = vmatpush1.msra.mxu0 0.0
        %1867 = vmatprep.subr.mxu0 0.0
        %1868 = vmatpush1.msra.mxu0 0.0
        %1869 = vmatprep.subr.mxu0 0.0
        %1870 = vmatpush1.msra.mxu0 0.0
        %1871 = vmatprep.subr.mxu0 0.0
        %1872 = vmatpush1.msra.mxu0 0.0
        %1873 = vmatprep.mubr.f32.mxu0 0.0
        %v1874 = vand.u32 %v1428, 4294901760
        %1875 = vmatmul.mubr.f32.gmra.mrb[0].mxu0 %v1874
        %v1876 = vpop.f32.mrb[0].mxu0
        %v1877 = vadd.f32 %v1805, %v1876
        %v1878 = vpop.f32.mrb[0].mxu0
        %1879 = vdwg.mxu0
        %v1880 = vxor.u32 %v1877, 2147483648
        %v1881 = vmul.f32 %v1880, 1.442695
        %v1882 = vpow.pop %v1881
        %v1883 = vadd.f32 %v1882, 1.0
        %v1884 = vrcp.pop %v1883
        %v1885 = vmul.f32 1.0, %v1884
        %v1886 = vld [vmem:[%s6] sm:$0xff]
        %v1888 = vsel %vm968, %v1885, 0
        %1890 = vmatprep.subr.mxu0 0.0
        %v1891 = vand.u32 %v1886, 4294901760
        %1892 = vmatpush1.msra.mxu0 %v1891
        %1893 = vmatprep.subr.mxu0 0.0
        %1894 = vmatpush1.msra.mxu0 0.0
        %1895 = vmatprep.subr.mxu0 0.0
        %1896 = vmatpush1.msra.mxu0 0.0
        %1897 = vmatprep.subr.mxu0 0.0
        %1898 = vmatpush1.msra.mxu0 0.0
        %1899 = vmatprep.subr.mxu0 0.0
        %1900 = vmatpush1.msra.mxu0 0.0
        %1901 = vmatprep.subr.mxu0 0.0
        %1902 = vmatpush1.msra.mxu0 0.0
        %1903 = vmatprep.subr.mxu0 0.0
        %1904 = vmatpush1.msra.mxu0 0.0
        %1905 = vmatprep.subr.mxu0 0.0
        %1906 = vmatpush1.msra.mxu0 0.0
        %1907 = vmatprep.subr.mxu0 0.0
        %1908 = vmatpush1.msra.mxu0 0.0
        %1909 = vmatprep.subr.mxu0 0.0
        %1910 = vmatpush1.msra.mxu0 0.0
        %1911 = vmatprep.subr.mxu0 0.0
        %1912 = vmatpush1.msra.mxu0 0.0
        %1913 = vmatprep.subr.mxu0 0.0
        %1914 = vmatpush1.msra.mxu0 0.0
        %1915 = vmatprep.subr.mxu0 0.0
        %1916 = vmatpush1.msra.mxu0 0.0
        %1917 = vmatprep.subr.mxu0 0.0
        %1918 = vmatpush1.msra.mxu0 0.0
        %1919 = vmatprep.subr.mxu0 0.0
        %1920 = vmatpush1.msra.mxu0 0.0
        %1921 = vmatprep.subr.mxu0 0.0
        %1922 = vmatpush1.msra.mxu0 0.0
        %1923 = vmatprep.subr.mxu0 0.0
        %1924 = vmatpush1.msra.mxu0 0.0
        %1925 = vmatprep.subr.mxu0 0.0
        %1926 = vmatpush1.msra.mxu0 0.0
        %1927 = vmatprep.subr.mxu0 0.0
        %1928 = vmatpush1.msra.mxu0 0.0
        %1929 = vmatprep.subr.mxu0 0.0
        %1930 = vmatpush1.msra.mxu0 0.0
        %1931 = vmatprep.subr.mxu0 0.0
        %1932 = vmatpush1.msra.mxu0 0.0
        %1933 = vmatprep.subr.mxu0 0.0
        %1934 = vmatpush1.msra.mxu0 0.0
        %1935 = vmatprep.subr.mxu0 0.0
        %1936 = vmatpush1.msra.mxu0 0.0
        %1937 = vmatprep.subr.mxu0 0.0
        %1938 = vmatpush1.msra.mxu0 0.0
        %1939 = vmatprep.subr.mxu0 0.0
        %1940 = vmatpush1.msra.mxu0 0.0
        %1941 = vmatprep.subr.mxu0 0.0
        %1942 = vmatpush1.msra.mxu0 0.0
        %1943 = vmatprep.subr.mxu0 0.0
        %1944 = vmatpush1.msra.mxu0 0.0
        %1945 = vmatprep.subr.mxu0 0.0
        %1946 = vmatpush1.msra.mxu0 0.0
        %1947 = vmatprep.subr.mxu0 0.0
        %1948 = vmatpush1.msra.mxu0 0.0
        %1949 = vmatprep.subr.mxu0 0.0
        %1950 = vmatpush1.msra.mxu0 0.0
        %1951 = vmatprep.subr.mxu0 0.0
        %1952 = vmatpush1.msra.mxu0 0.0
        %1953 = vmatprep.subr.mxu0 0.0
        %1954 = vmatpush1.msra.mxu0 0.0
        %1955 = vmatprep.mubr.f32.mxu0 0.0
        %v1956 = vand.u32 %v1888, 4294901760
        %v1957 = vsub.f32 %v1888, %v1956
        %v1958 = vand.u32 %v1957, 4294901760
        %v1959 = vsub.f32 %v1957, %v1958
        %v1960 = vand.u32 %v1959, 4294901760
        %1961 = vmatmul.mubr.f32.gmra.mrb[0].mxu0 %v1960
        %v1962 = vpop.f32.mrb[0].mxu0
        %v1963 = vadd.f32 0.0, %v1962
        %v1964 = vpop.f32.mrb[0].mxu0
        %1965 = vdwg.mxu0
        %1966 = vmatprep.subr.mxu0 0.0
        %v1967 = vand.u32 %v1886, 4294901760
        %v1968 = vsub.f32 %v1886, %v1967
        %v1969 = vand.u32 %v1968, 4294901760
        %v1970 = vsub.f32 %v1968, %v1969
        %v1971 = vand.u32 %v1970, 4294901760
        %1972 = vmatpush1.msra.mxu0 %v1971
        %1973 = vmatprep.subr.mxu0 0.0
        %1974 = vmatpush1.msra.mxu0 0.0
        %1975 = vmatprep.subr.mxu0 0.0
        %1976 = vmatpush1.msra.mxu0 0.0
        %1977 = vmatprep.subr.mxu0 0.0
        %1978 = vmatpush1.msra.mxu0 0.0
        %1979 = vmatprep.subr.mxu0 0.0
        %1980 = vmatpush1.msra.mxu0 0.0
        %1981 = vmatprep.subr.mxu0 0.0
        %1982 = vmatpush1.msra.mxu0 0.0
        %1983 = vmatprep.subr.mxu0 0.0
        %1984 = vmatpush1.msra.mxu0 0.0
        %1985 = vmatprep.subr.mxu0 0.0
        %1986 = vmatpush1.msra.mxu0 0.0
        %1987 = vmatprep.subr.mxu0 0.0
        %1988 = vmatpush1.msra.mxu0 0.0
        %1989 = vmatprep.subr.mxu0 0.0
        %1990 = vmatpush1.msra.mxu0 0.0
        %1991 = vmatprep.subr.mxu0 0.0
        %1992 = vmatpush1.msra.mxu0 0.0
        %1993 = vmatprep.subr.mxu0 0.0
        %1994 = vmatpush1.msra.mxu0 0.0
        %1995 = vmatprep.subr.mxu0 0.0
        %1996 = vmatpush1.msra.mxu0 0.0
        %1997 = vmatprep.subr.mxu0 0.0
        %1998 = vmatpush1.msra.mxu0 0.0
        %1999 = vmatprep.subr.mxu0 0.0
        %2000 = vmatpush1.msra.mxu0 0.0
        %2001 = vmatprep.subr.mxu0 0.0
        %2002 = vmatpush1.msra.mxu0 0.0
        %2003 = vmatprep.subr.mxu0 0.0
        %2004 = vmatpush1.msra.mxu0 0.0
        %2005 = vmatprep.subr.mxu0 0.0
        %2006 = vmatpush1.msra.mxu0 0.0
        %2007 = vmatprep.subr.mxu0 0.0
        %2008 = vmatpush1.msra.mxu0 0.0
        %2009 = vmatprep.subr.mxu0 0.0
        %2010 = vmatpush1.msra.mxu0 0.0
        %2011 = vmatprep.subr.mxu0 0.0
        %2012 = vmatpush1.msra.mxu0 0.0
        %2013 = vmatprep.subr.mxu0 0.0
        %2014 = vmatpush1.msra.mxu0 0.0
        %2015 = vmatprep.subr.mxu0 0.0
        %2016 = vmatpush1.msra.mxu0 0.0
        %2017 = vmatprep.subr.mxu0 0.0
        %2018 = vmatpush1.msra.mxu0 0.0
        %2019 = vmatprep.subr.mxu0 0.0
        %2020 = vmatpush1.msra.mxu0 0.0
        %2021 = vmatprep.subr.mxu0 0.0
        %2022 = vmatpush1.msra.mxu0 0.0
        %2023 = vmatprep.subr.mxu0 0.0
        %2024 = vmatpush1.msra.mxu0 0.0
        %2025 = vmatprep.subr.mxu0 0.0
        %2026 = vmatpush1.msra.mxu0 0.0
        %2027 = vmatprep.subr.mxu0 0.0
        %2028 = vmatpush1.msra.mxu0 0.0
        %2029 = vmatprep.subr.mxu0 0.0
        %2030 = vmatpush1.msra.mxu0 0.0
        %2031 = vmatprep.subr.mxu0 0.0
        %2032 = vmatpush1.msra.mxu0 0.0
        %2033 = vmatprep.subr.mxu0 0.0
        %2034 = vmatpush1.msra.mxu0 0.0
        %2035 = vmatprep.mubr.f32.mxu0 0.0
        %v2036 = vand.u32 %v1888, 4294901760
        %2037 = vmatmul.mubr.f32.gmra.mrb[0].mxu0 %v2036
        %v2038 = vpop.f32.mrb[0].mxu0
        %v2039 = vadd.f32 %v1963, %v2038
        %v2040 = vpop.f32.mrb[0].mxu0
        %2041 = vdwg.mxu0
        %2042 = vmatprep.subr.mxu0 0.0
        %v2043 = vand.u32 %v1886, 4294901760
        %v2044 = vsub.f32 %v1886, %v2043
        %2045 = vmatpush1.msra.mxu0 %v2044
        %2046 = vmatprep.subr.mxu0 0.0
        %2047 = vmatpush1.msra.mxu0 0.0
        %2048 = vmatprep.subr.mxu0 0.0
        %2049 = vmatpush1.msra.mxu0 0.0
        %2050 = vmatprep.subr.mxu0 0.0
        %2051 = vmatpush1.msra.mxu0 0.0
        %2052 = vmatprep.subr.mxu0 0.0
        %2053 = vmatpush1.msra.mxu0 0.0
        %2054 = vmatprep.subr.mxu0 0.0
        %2055 = vmatpush1.msra.mxu0 0.0
        %2056 = vmatprep.subr.mxu0 0.0
        %2057 = vmatpush1.msra.mxu0 0.0
        %2058 = vmatprep.subr.mxu0 0.0
        %2059 = vmatpush1.msra.mxu0 0.0
        %2060 = vmatprep.subr.mxu0 0.0
        %2061 = vmatpush1.msra.mxu0 0.0
        %2062 = vmatprep.subr.mxu0 0.0
        %2063 = vmatpush1.msra.mxu0 0.0
        %2064 = vmatprep.subr.mxu0 0.0
        %2065 = vmatpush1.msra.mxu0 0.0
        %2066 = vmatprep.subr.mxu0 0.0
        %2067 = vmatpush1.msra.mxu0 0.0
        %2068 = vmatprep.subr.mxu0 0.0
        %2069 = vmatpush1.msra.mxu0 0.0
        %2070 = vmatprep.subr.mxu0 0.0
        %2071 = vmatpush1.msra.mxu0 0.0
        %2072 = vmatprep.subr.mxu0 0.0
        %2073 = vmatpush1.msra.mxu0 0.0
        %2074 = vmatprep.subr.mxu0 0.0
        %2075 = vmatpush1.msra.mxu0 0.0
        %2076 = vmatprep.subr.mxu0 0.0
        %2077 = vmatpush1.msra.mxu0 0.0
        %2078 = vmatprep.subr.mxu0 0.0
        %2079 = vmatpush1.msra.mxu0 0.0
        %2080 = vmatprep.subr.mxu0 0.0
        %2081 = vmatpush1.msra.mxu0 0.0
        %2082 = vmatprep.subr.mxu0 0.0
        %2083 = vmatpush1.msra.mxu0 0.0
        %2084 = vmatprep.subr.mxu0 0.0
        %2085 = vmatpush1.msra.mxu0 0.0
        %2086 = vmatprep.subr.mxu0 0.0
        %2087 = vmatpush1.msra.mxu0 0.0
        %2088 = vmatprep.subr.mxu0 0.0
        %2089 = vmatpush1.msra.mxu0 0.0
        %2090 = vmatprep.subr.mxu0 0.0
        %2091 = vmatpush1.msra.mxu0 0.0
        %2092 = vmatprep.subr.mxu0 0.0
        %2093 = vmatpush1.msra.mxu0 0.0
        %2094 = vmatprep.subr.mxu0 0.0
        %2095 = vmatpush1.msra.mxu0 0.0
        %2096 = vmatprep.subr.mxu0 0.0
        %2097 = vmatpush1.msra.mxu0 0.0
        %2098 = vmatprep.subr.mxu0 0.0
        %2099 = vmatpush1.msra.mxu0 0.0
        %2100 = vmatprep.subr.mxu0 0.0
        %2101 = vmatpush1.msra.mxu0 0.0
        %2102 = vmatprep.subr.mxu0 0.0
        %2103 = vmatpush1.msra.mxu0 0.0
        %2104 = vmatprep.subr.mxu0 0.0
        %2105 = vmatpush1.msra.mxu0 0.0
        %2106 = vmatprep.subr.mxu0 0.0
        %2107 = vmatpush1.msra.mxu0 0.0
        %2108 = vmatprep.mubr.f32.mxu0 0.0
        %v2109 = vand.u32 %v1888, 4294901760
        %v2110 = vsub.f32 %v1888, %v2109
        %2111 = vmatmul.mubr.f32.gmra.mrb[0].mxu0 %v2110
        %v2112 = vpop.f32.mrb[0].mxu0
        %v2113 = vadd.f32 %v2039, %v2112
        %v2114 = vpop.f32.mrb[0].mxu0
        %2115 = vdwg.mxu0
        %2116 = vmatprep.subr.mxu0 0.0
        %v2117 = vand.u32 %v1886, 4294901760
        %2118 = vmatpush1.msra.mxu0 %v2117
        %2119 = vmatprep.subr.mxu0 0.0
        %2120 = vmatpush1.msra.mxu0 0.0
        %2121 = vmatprep.subr.mxu0 0.0
        %2122 = vmatpush1.msra.mxu0 0.0
        %2123 = vmatprep.subr.mxu0 0.0
        %2124 = vmatpush1.msra.mxu0 0.0
        %2125 = vmatprep.subr.mxu0 0.0
        %2126 = vmatpush1.msra.mxu0 0.0
        %2127 = vmatprep.subr.mxu0 0.0
        %2128 = vmatpush1.msra.mxu0 0.0
        %2129 = vmatprep.subr.mxu0 0.0
        %2130 = vmatpush1.msra.mxu0 0.0
        %2131 = vmatprep.subr.mxu0 0.0
        %2132 = vmatpush1.msra.mxu0 0.0
        %2133 = vmatprep.subr.mxu0 0.0
        %2134 = vmatpush1.msra.mxu0 0.0
        %2135 = vmatprep.subr.mxu0 0.0
        %2136 = vmatpush1.msra.mxu0 0.0
        %2137 = vmatprep.subr.mxu0 0.0
        %2138 = vmatpush1.msra.mxu0 0.0
        %2139 = vmatprep.subr.mxu0 0.0
        %2140 = vmatpush1.msra.mxu0 0.0
        %2141 = vmatprep.subr.mxu0 0.0
        %2142 = vmatpush1.msra.mxu0 0.0
        %2143 = vmatprep.subr.mxu0 0.0
        %2144 = vmatpush1.msra.mxu0 0.0
        %2145 = vmatprep.subr.mxu0 0.0
        %2146 = vmatpush1.msra.mxu0 0.0
        %2147 = vmatprep.subr.mxu0 0.0
        %2148 = vmatpush1.msra.mxu0 0.0
        %2149 = vmatprep.subr.mxu0 0.0
        %2150 = vmatpush1.msra.mxu0 0.0
        %2151 = vmatprep.subr.mxu0 0.0
        %2152 = vmatpush1.msra.mxu0 0.0
        %2153 = vmatprep.subr.mxu0 0.0
        %2154 = vmatpush1.msra.mxu0 0.0
        %2155 = vmatprep.subr.mxu0 0.0
        %2156 = vmatpush1.msra.mxu0 0.0
        %2157 = vmatprep.subr.mxu0 0.0
        %2158 = vmatpush1.msra.mxu0 0.0
        %2159 = vmatprep.subr.mxu0 0.0
        %2160 = vmatpush1.msra.mxu0 0.0
        %2161 = vmatprep.subr.mxu0 0.0
        %2162 = vmatpush1.msra.mxu0 0.0
        %2163 = vmatprep.subr.mxu0 0.0
        %2164 = vmatpush1.msra.mxu0 0.0
        %2165 = vmatprep.subr.mxu0 0.0
        %2166 = vmatpush1.msra.mxu0 0.0
        %2167 = vmatprep.subr.mxu0 0.0
        %2168 = vmatpush1.msra.mxu0 0.0
        %2169 = vmatprep.subr.mxu0 0.0
        %2170 = vmatpush1.msra.mxu0 0.0
        %2171 = vmatprep.subr.mxu0 0.0
        %2172 = vmatpush1.msra.mxu0 0.0
        %2173 = vmatprep.subr.mxu0 0.0
        %2174 = vmatpush1.msra.mxu0 0.0
        %2175 = vmatprep.subr.mxu0 0.0
        %2176 = vmatpush1.msra.mxu0 0.0
        %2177 = vmatprep.subr.mxu0 0.0
        %2178 = vmatpush1.msra.mxu0 0.0
        %2179 = vmatprep.subr.mxu0 0.0
        %2180 = vmatpush1.msra.mxu0 0.0
        %2181 = vmatprep.mubr.f32.mxu0 0.0
        %v2182 = vand.u32 %v1888, 4294901760
        %v2183 = vsub.f32 %v1888, %v2182
        %v2184 = vand.u32 %v2183, 4294901760
        %2185 = vmatmul.mubr.f32.gmra.mrb[0].mxu0 %v2184
        %v2186 = vpop.f32.mrb[0].mxu0
        %v2187 = vadd.f32 %v2113, %v2186
        %v2188 = vpop.f32.mrb[0].mxu0
        %2189 = vdwg.mxu0
        %2190 = vmatprep.subr.mxu0 0.0
        %v2191 = vand.u32 %v1886, 4294901760
        %v2192 = vsub.f32 %v1886, %v2191
        %v2193 = vand.u32 %v2192, 4294901760
        %2194 = vmatpush1.msra.mxu0 %v2193
        %2195 = vmatprep.subr.mxu0 0.0
        %2196 = vmatpush1.msra.mxu0 0.0
        %2197 = vmatprep.subr.mxu0 0.0
        %2198 = vmatpush1.msra.mxu0 0.0
        %2199 = vmatprep.subr.mxu0 0.0
        %2200 = vmatpush1.msra.mxu0 0.0
        %2201 = vmatprep.subr.mxu0 0.0
        %2202 = vmatpush1.msra.mxu0 0.0
        %2203 = vmatprep.subr.mxu0 0.0
        %2204 = vmatpush1.msra.mxu0 0.0
        %2205 = vmatprep.subr.mxu0 0.0
        %2206 = vmatpush1.msra.mxu0 0.0
        %2207 = vmatprep.subr.mxu0 0.0
        %2208 = vmatpush1.msra.mxu0 0.0
        %2209 = vmatprep.subr.mxu0 0.0
        %2210 = vmatpush1.msra.mxu0 0.0
        %2211 = vmatprep.subr.mxu0 0.0
        %2212 = vmatpush1.msra.mxu0 0.0
        %2213 = vmatprep.subr.mxu0 0.0
        %2214 = vmatpush1.msra.mxu0 0.0
        %2215 = vmatprep.subr.mxu0 0.0
        %2216 = vmatpush1.msra.mxu0 0.0
        %2217 = vmatprep.subr.mxu0 0.0
        %2218 = vmatpush1.msra.mxu0 0.0
        %2219 = vmatprep.subr.mxu0 0.0
        %2220 = vmatpush1.msra.mxu0 0.0
        %2221 = vmatprep.subr.mxu0 0.0
        %2222 = vmatpush1.msra.mxu0 0.0
        %2223 = vmatprep.subr.mxu0 0.0
        %2224 = vmatpush1.msra.mxu0 0.0
        %2225 = vmatprep.subr.mxu0 0.0
        %2226 = vmatpush1.msra.mxu0 0.0
        %2227 = vmatprep.subr.mxu0 0.0
        %2228 = vmatpush1.msra.mxu0 0.0
        %2229 = vmatprep.subr.mxu0 0.0
        %2230 = vmatpush1.msra.mxu0 0.0
        %2231 = vmatprep.subr.mxu0 0.0
        %2232 = vmatpush1.msra.mxu0 0.0
        %2233 = vmatprep.subr.mxu0 0.0
        %2234 = vmatpush1.msra.mxu0 0.0
        %2235 = vmatprep.subr.mxu0 0.0
        %2236 = vmatpush1.msra.mxu0 0.0
        %2237 = vmatprep.subr.mxu0 0.0
        %2238 = vmatpush1.msra.mxu0 0.0
        %2239 = vmatprep.subr.mxu0 0.0
        %2240 = vmatpush1.msra.mxu0 0.0
        %2241 = vmatprep.subr.mxu0 0.0
        %2242 = vmatpush1.msra.mxu0 0.0
        %2243 = vmatprep.subr.mxu0 0.0
        %2244 = vmatpush1.msra.mxu0 0.0
        %2245 = vmatprep.subr.mxu0 0.0
        %2246 = vmatpush1.msra.mxu0 0.0
        %2247 = vmatprep.subr.mxu0 0.0
        %2248 = vmatpush1.msra.mxu0 0.0
        %2249 = vmatprep.subr.mxu0 0.0
        %2250 = vmatpush1.msra.mxu0 0.0
        %2251 = vmatprep.subr.mxu0 0.0
        %2252 = vmatpush1.msra.mxu0 0.0
        %2253 = vmatprep.subr.mxu0 0.0
        %2254 = vmatpush1.msra.mxu0 0.0
        %2255 = vmatprep.subr.mxu0 0.0
        %2256 = vmatpush1.msra.mxu0 0.0
        %2257 = vmatprep.mubr.f32.mxu0 0.0
        %v2258 = vand.u32 %v1888, 4294901760
        %2259 = vmatmul.mubr.f32.gmra.mrb[0].mxu0 %v2258
        %v2260 = vpop.f32.mrb[0].mxu0
        %v2261 = vadd.f32 %v2187, %v2260
        %v2262 = vpop.f32.mrb[0].mxu0
        %2263 = vdwg.mxu0
        %2264 = vmatprep.subr.mxu0 0.0
        %v2265 = vand.u32 %v1886, 4294901760
        %2266 = vmatpush1.msra.mxu0 %v2265
        %2267 = vmatprep.subr.mxu0 0.0
        %2268 = vmatpush1.msra.mxu0 0.0
        %2269 = vmatprep.subr.mxu0 0.0
        %2270 = vmatpush1.msra.mxu0 0.0
        %2271 = vmatprep.subr.mxu0 0.0
        %2272 = vmatpush1.msra.mxu0 0.0
        %2273 = vmatprep.subr.mxu0 0.0
        %2274 = vmatpush1.msra.mxu0 0.0
        %2275 = vmatprep.subr.mxu0 0.0
        %2276 = vmatpush1.msra.mxu0 0.0
        %2277 = vmatprep.subr.mxu0 0.0
        %2278 = vmatpush1.msra.mxu0 0.0
        %2279 = vmatprep.subr.mxu0 0.0
        %2280 = vmatpush1.msra.mxu0 0.0
        %2281 = vmatprep.subr.mxu0 0.0
        %2282 = vmatpush1.msra.mxu0 0.0
        %2283 = vmatprep.subr.mxu0 0.0
        %2284 = vmatpush1.msra.mxu0 0.0
        %2285 = vmatprep.subr.mxu0 0.0
        %2286 = vmatpush1.msra.mxu0 0.0
        %2287 = vmatprep.subr.mxu0 0.0
        %2288 = vmatpush1.msra.mxu0 0.0
        %2289 = vmatprep.subr.mxu0 0.0
        %2290 = vmatpush1.msra.mxu0 0.0
        %2291 = vmatprep.subr.mxu0 0.0
        %2292 = vmatpush1.msra.mxu0 0.0
        %2293 = vmatprep.subr.mxu0 0.0
        %2294 = vmatpush1.msra.mxu0 0.0
        %2295 = vmatprep.subr.mxu0 0.0
        %2296 = vmatpush1.msra.mxu0 0.0
        %2297 = vmatprep.subr.mxu0 0.0
        %2298 = vmatpush1.msra.mxu0 0.0
        %2299 = vmatprep.subr.mxu0 0.0
        %2300 = vmatpush1.msra.mxu0 0.0
        %2301 = vmatprep.subr.mxu0 0.0
        %2302 = vmatpush1.msra.mxu0 0.0
        %2303 = vmatprep.subr.mxu0 0.0
        %2304 = vmatpush1.msra.mxu0 0.0
        %2305 = vmatprep.subr.mxu0 0.0
        %2306 = vmatpush1.msra.mxu0 0.0
        %2307 = vmatprep.subr.mxu0 0.0
        %2308 = vmatpush1.msra.mxu0 0.0
        %2309 = vmatprep.subr.mxu0 0.0
        %2310 = vmatpush1.msra.mxu0 0.0
        %2311 = vmatprep.subr.mxu0 0.0
        %2312 = vmatpush1.msra.mxu0 0.0
        %2313 = vmatprep.subr.mxu0 0.0
        %2314 = vmatpush1.msra.mxu0 0.0
        %2315 = vmatprep.subr.mxu0 0.0
        %2316 = vmatpush1.msra.mxu0 0.0
        %2317 = vmatprep.subr.mxu0 0.0
        %2318 = vmatpush1.msra.mxu0 0.0
        %2319 = vmatprep.subr.mxu0 0.0
        %2320 = vmatpush1.msra.mxu0 0.0
        %2321 = vmatprep.subr.mxu0 0.0
        %2322 = vmatpush1.msra.mxu0 0.0
        %2323 = vmatprep.subr.mxu0 0.0
        %2324 = vmatpush1.msra.mxu0 0.0
        %2325 = vmatprep.subr.mxu0 0.0
        %2326 = vmatpush1.msra.mxu0 0.0
        %2327 = vmatprep.subr.mxu0 0.0
        %2328 = vmatpush1.msra.mxu0 0.0
        %2329 = vmatprep.mubr.f32.mxu0 0.0
        %v2330 = vand.u32 %v1888, 4294901760
        %2331 = vmatmul.mubr.f32.gmra.mrb[0].mxu0 %v2330
        %v2332 = vpop.f32.mrb[0].mxu0
        %v2333 = vadd.f32 %v2261, %v2332
        %v2334 = vpop.f32.mrb[0].mxu0
        %2335 = vdwg.mxu0
        %v2336 = vmul.f32 %v302, %v2333
        %2337 = vst [vmem:[%s293] sm:$0xff] %v2336
        %s2338 = sand.u32 %s197, 1
        %s2339 = scalar_lea.sflag [#allocation3], %s2338
        %s2340 = sand.u32 %s197, 1
        %s2341 = smul.addr %s2340, 8
        %s2342 = scalar_lea.vmem [#allocation2], %s2341
        // Predicated region
        $region49: #{tpu_custom_call.1} parent=47 // pred_check
          %p2343 = pneg %p207
        $region50: #{tpu_custom_call.1} parent=47 // pred_check_branch
          %2345 = sbr.rel (%p2343) target = $region52
        $region51: #{tpu_custom_call.1} parent=47 // pred_region
          %s2347 = ssub.s32 128, 128
          %2348 = vsyncadd %s2339, %s2347
          %s2349 = smul.addr %s25, 2
          %s2350 = sadd.s32 %s26, %s2349
          %s2351 = smul.addr %s2350, 128
          %s2352 = scalar_lea.hbm %s7, %s2351
          %s2354 = sshll.u32 %s2342, 4
          %s2355 = int_to_ptr.vmem [resolvable:$true] %s2354
          %2357 = dma.vmem_to_hbm [thread:$0]  %s2355, 128, %s2352, %s2339
        $region52: #{tpu_custom_call.1} parent=47 // pred_fallthru
          _
      $region48: #{tpu_custom_call.1} parent=5 // pred_fallthru
        _
      %p2358 = scmp.le.s32.totalorder 2, %s16
      // Predicated region
      $region53: #{tpu_custom_call.1} parent=5 // pred_check
        %p2359 = pneg %p2358
      $region54: #{tpu_custom_call.1} parent=5 // pred_check_branch
        %2361 = sbr.rel (%p2359) target = $region56
      $region55: #{tpu_custom_call.1} parent=5 // pred_region
        %s2362 = ssub.s32 %s16, 2
        // Predicated region
        $region57: #{tpu_custom_call.1} parent=55 // pred_check
          %p2363 = pneg %p213
        $region58: #{tpu_custom_call.1} parent=55 // pred_check_branch
          %2365 = sbr.rel (%p2363) target = $region60
        $region59: #{tpu_custom_call.1} parent=55 // pred_region
          %s2366 = sand.u32 %s198, 1
          %s2367 = scalar_lea.sflag [#allocation3], %s2366
          %s2368 = sand.u32 %s198, 1
          %s2369 = smul.addr %s2368, 8
          %s2370 = scalar_lea.vmem [#allocation2], %s2369
          %2371 = dma.done %s2367, 128
        $region60: #{tpu_custom_call.1} parent=55 // pred_fallthru
          _
      $region56: #{tpu_custom_call.1} parent=5 // pred_fallthru
        _
    $region6: #{tpu_custom_call.1} parent=1 // loop_footer
      %s20 = sadd.s32 1, %s16
    $region7: #{tpu_custom_call.1} parent=1 // loop_footer_branch
      %15 = sbr.rel target = $region3
    $region8: #{tpu_custom_call.1} parent=1 // loop_exit
      _
    %2372 = vsyncpa [#allocation3], 1
    %s2373 = scalar_lea.sflag [#allocation3], 1
    %2374 = vsyncpa %s2373, 1

</llo_original>
